<compile_context>
chip_gen: v5e
topology: v5e:2x2
jax: 0.10.0
libtpu: 0.0.40
codegen_flags: <defaults>
</compile_context>

<pallas_src>
import functools

import jax
import jax.numpy as jnp
from jax.experimental import pallas as pl
from jax.experimental.pallas import tpu as pltpu


def _pinn_kernel(*refs, n_lin, f_out):
    """refs = (x_ref, w0..w{L-1}, b0..b{L-1}, out_ref).

    w_i is stored (F_in, F_out) (transpose of PyTorch nn.Linear weight); the
    global input normalization is already folded into w0/b0; the last
    weight/bias are zero-padded to 128 output lanes (VMEM only), the store
    narrows to f_out.
    """
    x_ref = refs[0]
    w_refs = refs[1:1 + n_lin]
    b_refs = refs[1 + n_lin:1 + 2 * n_lin]
    o_ref = refs[1 + 2 * n_lin]

    # Normalization is folded into layer 0, so start directly from the tile.
    a = x_ref[...]

    # Hidden layers 0 .. n_lin-3 with LeakyReLU(0.01).
    for i in range(n_lin - 2):
        z = (jnp.dot(a, w_refs[i][...], preferred_element_type=jnp.float32)
             + b_refs[i][...])
        a = jnp.where(z > 0, z, 0.01 * z)

    # linears[-2]: loaded once, applied twice to match the PyTorch reference
    # (last LeakyReLU iteration of the loop, then re-applied before tanh).
    w_pen = w_refs[n_lin - 2][...]
    b_pen = b_refs[n_lin - 2][...]
    z = jnp.dot(a, w_pen, preferred_element_type=jnp.float32) + b_pen
    a = jnp.where(z > 0, z, 0.01 * z)
    a = jnp.tanh(jnp.dot(a, w_pen, preferred_element_type=jnp.float32) + b_pen)

    # Final linear on the 128-padded weight (one clean MXU pass), narrow store
    # of only the f_out real columns -> no padded HBM traffic.
    z = (jnp.dot(a, w_refs[n_lin - 1][...], preferred_element_type=jnp.float32)
         + b_refs[n_lin - 1][...])
    o_ref[...] = z[:, :f_out]


def _choose_tile(n_rows, max_tile=1024):
    """Row tile: large (amortize per-step overhead) but keep >=4 grid steps."""
    t = min(max_tile, pl.cdiv(n_rows, 4))
    t = max(8, ((t + 7) // 8) * 8)      # sublane multiple
    return t


def pinn_forward(x, weights, biases, layers, tile_n=None):
    """Pallas forward. weights[i]: (layers[i], layers[i+1]); biases[i]: (1, layers[i+1])."""
    n_lin = len(layers) - 1
    N, f_in = x.shape
    f_out = layers[-1]

    x = x.astype(jnp.float32)

    # Global scaling statistics (torch.mean / torch.std unbiased over ALL
    # elements of X), computed once here over the *unpadded* input.
    n_elem = x.size
    mean = jnp.mean(x)
    var = jnp.sum((x - mean) ** 2) / (n_elem - 1)
    inv_std = 1.0 / jnp.sqrt(var)

    w = [wi.astype(jnp.float32) for wi in weights]
    b = [bi.astype(jnp.float32).reshape(1, -1) for bi in biases]

    # Fold (X - mean) * inv_std into layer 0 (algebraically identical).
    b[0] = b[0] - (mean * inv_std) * jnp.sum(w[0], axis=0, keepdims=True)
    w[0] = w[0] * inv_std

    # Zero-pad the final layer to 128 lanes *inside VMEM only* (the HBM output
    # stays f_out wide); zero padding is numerically identical in lanes :f_out.
    pad_out = 128
    w[-1] = jnp.zeros((weights[-1].shape[0], pad_out),
                      jnp.float32).at[:, :f_out].set(w[-1])
    b[-1] = jnp.zeros((1, pad_out), jnp.float32).at[:, :f_out].set(b[-1])

    # Row tiling with padding for arbitrary N.
    if tile_n is None:
        tile_n = _choose_tile(N)
    tile_n = max(8, ((tile_n + 7) // 8) * 8)
    grid_n = pl.cdiv(N, tile_n)
    n_pad = grid_n * tile_n
    x_in = x if n_pad == N else jnp.zeros((n_pad, f_in), jnp.float32).at[:N].set(x)

    # Weights/biases: untiled VMEM operands -> copied into VMEM once and kept
    # resident across the whole grid (~25 KiB total), no per-step DMA.
    vmem = pl.BlockSpec(memory_space=pltpu.MemorySpace.VMEM)

    kernel = functools.partial(_pinn_kernel, n_lin=n_lin, f_out=f_out)
    out = pl.pallas_call(
        kernel,
        out_shape=jax.ShapeDtypeStruct((n_pad, f_out), jnp.float32),
        grid=(grid_n,),
        in_specs=[pl.BlockSpec((tile_n, f_in), lambda i: (i, 0))]   # x tile
                 + [vmem] * (2 * n_lin),                            # resident params
        out_specs=pl.BlockSpec((tile_n, f_out), lambda i: (i, 0)),
        compiler_params=pltpu.CompilerParams(
            dimension_semantics=("parallel",)),
    )(x_in, *w, *b)

    return out if n_pad == N else out[:N]


def pinn_reference(x, weights, biases, layers):
    """Plain-JAX reference mirroring the PyTorch forward exactly."""
    X = x.astype(jnp.float32)
    a = (X - jnp.mean(X)) / jnp.std(X, ddof=1)
    n_lin = len(layers) - 1
    for i in range(len(layers) - 2):
        z = a @ weights[i] + biases[i]
        a = jnp.where(z > 0, z, 0.01 * z)
    a = jnp.tanh(a @ weights[n_lin - 2] + biases[n_lin - 2])
    return a @ weights[n_lin - 1] + biases[n_lin - 1]


def init_params(key, layers):
    """Deterministic init (PyTorch-Linear-style uniform bounds)."""
    weights, biases = [], []
    for i in range(len(layers) - 1):
        key, kw, kb = jax.random.split(key, 3)
        bound = 1.0 / (layers[i] ** 0.5)
        W = jax.random.uniform(kw, (layers[i], layers[i + 1]), jnp.float32,
                               minval=-bound, maxval=bound)
        b = jax.random.uniform(kb, (1, layers[i + 1]), jnp.float32,
                               minval=-bound, maxval=bound)
        weights.append(W)
        biases.append(b)
    return weights, biases


if __name__ == "__main__":
    # Taylor-Green vortex PINN: inputs (x, y, t) -> outputs (u, v, p)
    layers = [3, 32, 32, 32, 3]
    N = 1000   # deliberately NOT a multiple of the tile -> exercises padding;
               # auto tile -> 256 rows/step, 4 grid steps (v7x-friendly)

    key = jax.random.PRNGKey(0)
    key, kx = jax.random.split(key)
    X = jax.random.normal(kx, (N, layers[0]), dtype=jnp.float32) * 2.0

    weights, biases = init_params(key, layers)

    out = pinn_forward(X, weights, biases, layers)
    out = jax.block_until_ready(out)

    ref = pinn_reference(X, weights, biases, layers)
    assert out.shape == (N, layers[-1])
    assert out.dtype == jnp.float32
    assert jnp.allclose(out, ref, atol=1e-4, rtol=1e-4), \
        f"max abs err {jnp.max(jnp.abs(out - ref))}"

    print("KERNEL_OK")
</pallas_src>

<mosaic_0001>
module attributes {stable_mosaic.version = 11 : i64} {
  func.func @_pinn_kernel(%arg0: i32, %arg1: memref<256x3xf32, #tpu.memory_space<vmem>>, %arg2: memref<3x32xf32, #tpu.memory_space<vmem>>, %arg3: memref<32x32xf32, #tpu.memory_space<vmem>>, %arg4: memref<32x32xf32, #tpu.memory_space<vmem>>, %arg5: memref<32x128xf32, #tpu.memory_space<vmem>>, %arg6: memref<1x32xf32, #tpu.memory_space<vmem>>, %arg7: memref<1x32xf32, #tpu.memory_space<vmem>>, %arg8: memref<1x32xf32, #tpu.memory_space<vmem>>, %arg9: memref<1x128xf32, #tpu.memory_space<vmem>>, %arg10: memref<256x3xf32, #tpu.memory_space<vmem>>) attributes {dimension_semantics = [#tpu.dimension_semantics<parallel>], iteration_bounds = array<i64: 4>, scalar_prefetch = 0 : i64, scratch_operands = 0 : i64, tpu.core_type = #tpu.core_type<tc>, window_params = [{transform_indices = @transform_0, window_bounds = array<i64: 256, 3>}, {pipeline_mode = #tpu.pipeline_mode<synchronous>, transform_indices = @transform_1, window_bounds = array<i64: 3, 32>}, {pipeline_mode = #tpu.pipeline_mode<synchronous>, transform_indices = @transform_2, window_bounds = array<i64: 32, 32>}, {pipeline_mode = #tpu.pipeline_mode<synchronous>, transform_indices = @transform_3, window_bounds = array<i64: 32, 32>}, {pipeline_mode = #tpu.pipeline_mode<synchronous>, transform_indices = @transform_4, window_bounds = array<i64: 32, 128>}, {pipeline_mode = #tpu.pipeline_mode<synchronous>, transform_indices = @transform_5, window_bounds = array<i64: 1, 32>}, {pipeline_mode = #tpu.pipeline_mode<synchronous>, transform_indices = @transform_6, window_bounds = array<i64: 1, 32>}, {pipeline_mode = #tpu.pipeline_mode<synchronous>, transform_indices = @transform_7, window_bounds = array<i64: 1, 32>}, {pipeline_mode = #tpu.pipeline_mode<synchronous>, transform_indices = @transform_8, window_bounds = array<i64: 1, 128>}, {transform_indices = @transform_9, window_bounds = array<i64: 256, 3>}]} {
    %c0 = arith.constant 0 : index
    %c0_0 = arith.constant 0 : index
    %0 = vector.load %arg1[%c0, %c0_0] : memref<256x3xf32, #tpu.memory_space<vmem>>, vector<256x3xf32>
    %c0_1 = arith.constant 0 : index
    %c0_2 = arith.constant 0 : index
    %1 = vector.load %arg2[%c0_1, %c0_2] : memref<3x32xf32, #tpu.memory_space<vmem>>, vector<3x32xf32>
    %cst = arith.constant dense<0.000000e+00> : vector<256x32xf32>
    %2 = tpu.matmul %0, %1, %cst {dimension_numbers = #tpu.dot_dimension_numbers<[1], [0], [0], [1], [0, 0, 1, 1], [], []>} : vector<256x3xf32>, vector<3x32xf32>, vector<256x32xf32> -> vector<256x32xf32>
    %c0_3 = arith.constant 0 : index
    %c0_4 = arith.constant 0 : index
    %3 = vector.load %arg6[%c0_3, %c0_4] : memref<1x32xf32, #tpu.memory_space<vmem>>, vector<1x32xf32>
    %4 = vector.broadcast %3 : vector<1x32xf32> to vector<256x32xf32>
    %5 = arith.addf %2, %4 : vector<256x32xf32>
    %cst_5 = arith.constant 0.000000e+00 : f32
    %6 = vector.broadcast %cst_5 : f32 to vector<256x32xf32>
    %7 = arith.cmpf ogt, %5, %6 : vector<256x32xf32>
    %cst_6 = arith.constant 0.00999999977 : f32
    %8 = vector.broadcast %cst_6 : f32 to vector<256x32xf32>
    %9 = arith.mulf %8, %5 : vector<256x32xf32>
    %10 = arith.select %7, %5, %9 : vector<256x32xi1>, vector<256x32xf32>
    %c0_7 = arith.constant 0 : index
    %c0_8 = arith.constant 0 : index
    %11 = vector.load %arg3[%c0_7, %c0_8] : memref<32x32xf32, #tpu.memory_space<vmem>>, vector<32x32xf32>
    %cst_9 = arith.constant dense<0.000000e+00> : vector<256x32xf32>
    %12 = tpu.matmul %10, %11, %cst_9 {dimension_numbers = #tpu.dot_dimension_numbers<[1], [0], [0], [1], [0, 0, 1, 1], [], []>} : vector<256x32xf32>, vector<32x32xf32>, vector<256x32xf32> -> vector<256x32xf32>
    %c0_10 = arith.constant 0 : index
    %c0_11 = arith.constant 0 : index
    %13 = vector.load %arg7[%c0_10, %c0_11] : memref<1x32xf32, #tpu.memory_space<vmem>>, vector<1x32xf32>
    %14 = vector.broadcast %13 : vector<1x32xf32> to vector<256x32xf32>
    %15 = arith.addf %12, %14 : vector<256x32xf32>
    %cst_12 = arith.constant 0.000000e+00 : f32
    %16 = vector.broadcast %cst_12 : f32 to vector<256x32xf32>
    %17 = arith.cmpf ogt, %15, %16 : vector<256x32xf32>
    %cst_13 = arith.constant 0.00999999977 : f32
    %18 = vector.broadcast %cst_13 : f32 to vector<256x32xf32>
    %19 = arith.mulf %18, %15 : vector<256x32xf32>
    %20 = arith.select %17, %15, %19 : vector<256x32xi1>, vector<256x32xf32>
    %c0_14 = arith.constant 0 : index
    %c0_15 = arith.constant 0 : index
    %21 = vector.load %arg4[%c0_14, %c0_15] : memref<32x32xf32, #tpu.memory_space<vmem>>, vector<32x32xf32>
    %c0_16 = arith.constant 0 : index
    %c0_17 = arith.constant 0 : index
    %22 = vector.load %arg8[%c0_16, %c0_17] : memref<1x32xf32, #tpu.memory_space<vmem>>, vector<1x32xf32>
    %cst_18 = arith.constant dense<0.000000e+00> : vector<256x32xf32>
    %23 = tpu.matmul %20, %21, %cst_18 {dimension_numbers = #tpu.dot_dimension_numbers<[1], [0], [0], [1], [0, 0, 1, 1], [], []>} : vector<256x32xf32>, vector<32x32xf32>, vector<256x32xf32> -> vector<256x32xf32>
    %24 = vector.broadcast %22 : vector<1x32xf32> to vector<256x32xf32>
    %25 = arith.addf %23, %24 : vector<256x32xf32>
    %cst_19 = arith.constant 0.000000e+00 : f32
    %26 = vector.broadcast %cst_19 : f32 to vector<256x32xf32>
    %27 = arith.cmpf ogt, %25, %26 : vector<256x32xf32>
    %cst_20 = arith.constant 0.00999999977 : f32
    %28 = vector.broadcast %cst_20 : f32 to vector<256x32xf32>
    %29 = arith.mulf %28, %25 : vector<256x32xf32>
    %30 = arith.select %27, %25, %29 : vector<256x32xi1>, vector<256x32xf32>
    %cst_21 = arith.constant dense<0.000000e+00> : vector<256x32xf32>
    %31 = tpu.matmul %30, %21, %cst_21 {dimension_numbers = #tpu.dot_dimension_numbers<[1], [0], [0], [1], [0, 0, 1, 1], [], []>} : vector<256x32xf32>, vector<32x32xf32>, vector<256x32xf32> -> vector<256x32xf32>
    %32 = vector.broadcast %22 : vector<1x32xf32> to vector<256x32xf32>
    %33 = arith.addf %31, %32 : vector<256x32xf32>
    %34 = math.tanh %33 : vector<256x32xf32>
    %c0_22 = arith.constant 0 : index
    %c0_23 = arith.constant 0 : index
    %35 = vector.load %arg5[%c0_22, %c0_23] : memref<32x128xf32, #tpu.memory_space<vmem>>, vector<32x128xf32>
    %cst_24 = arith.constant dense<0.000000e+00> : vector<256x128xf32>
    %36 = tpu.matmul %34, %35, %cst_24 {dimension_numbers = #tpu.dot_dimension_numbers<[1], [0], [0], [1], [0, 0, 1, 1], [], []>} : vector<256x32xf32>, vector<32x128xf32>, vector<256x128xf32> -> vector<256x128xf32>
    %c0_25 = arith.constant 0 : index
    %c0_26 = arith.constant 0 : index
    %37 = vector.load %arg9[%c0_25, %c0_26] : memref<1x128xf32, #tpu.memory_space<vmem>>, vector<1x128xf32>
    %38 = vector.broadcast %37 : vector<1x128xf32> to vector<256x128xf32>
    %39 = arith.addf %36, %38 : vector<256x128xf32>
    %40 = vector.extract_strided_slice %39 {offsets = [0, 0], sizes = [256, 3], strides = [1, 1]} : vector<256x128xf32> to vector<256x3xf32>
    %c0_27 = arith.constant 0 : index
    %c0_28 = arith.constant 0 : index
    %41 = vector.load %arg10[%c0_27, %c0_28] : memref<256x3xf32, #tpu.memory_space<vmem>>, vector<256x3xf32>
    tpu.vector_store %arg10[%c0_27, %c0_28], %40 {strides = array<i32>} : memref<256x3xf32, #tpu.memory_space<vmem>>, vector<256x3xf32>,
    return
  }
  func.func @transform_0(%arg0: i32) -> (i32, i32) {
    %c0_i32 = arith.constant 0 : i32
    %c0_i32_0 = arith.constant 0 : i32
    return %arg0, %c0_i32 : i32, i32
  }
  func.func @transform_1(%arg0: i32) -> (i32, i32) {
    %c0_i32 = arith.constant 0 : i32
    %c0_i32_0 = arith.constant 0 : i32
    %c0_i32_1 = arith.constant 0 : i32
    return %c0_i32, %c0_i32_0 : i32, i32
  }
  func.func @transform_2(%arg0: i32) -> (i32, i32) {
    %c0_i32 = arith.constant 0 : i32
    %c0_i32_0 = arith.constant 0 : i32
    %c0_i32_1 = arith.constant 0 : i32
    return %c0_i32, %c0_i32_0 : i32, i32
  }
  func.func @transform_3(%arg0: i32) -> (i32, i32) {
    %c0_i32 = arith.constant 0 : i32
    %c0_i32_0 = arith.constant 0 : i32
    %c0_i32_1 = arith.constant 0 : i32
    return %c0_i32, %c0_i32_0 : i32, i32
  }
  func.func @transform_4(%arg0: i32) -> (i32, i32) {
    %c0_i32 = arith.constant 0 : i32
    %c0_i32_0 = arith.constant 0 : i32
    %c0_i32_1 = arith.constant 0 : i32
    return %c0_i32, %c0_i32_0 : i32, i32
  }
  func.func @transform_5(%arg0: i32) -> (i32, i32) {
    %c0_i32 = arith.constant 0 : i32
    %c0_i32_0 = arith.constant 0 : i32
    %c0_i32_1 = arith.constant 0 : i32
    return %c0_i32, %c0_i32_0 : i32, i32
  }
  func.func @transform_6(%arg0: i32) -> (i32, i32) {
    %c0_i32 = arith.constant 0 : i32
    %c0_i32_0 = arith.constant 0 : i32
    %c0_i32_1 = arith.constant 0 : i32
    return %c0_i32, %c0_i32_0 : i32, i32
  }
  func.func @transform_7(%arg0: i32) -> (i32, i32) {
    %c0_i32 = arith.constant 0 : i32
    %c0_i32_0 = arith.constant 0 : i32
    %c0_i32_1 = arith.constant 0 : i32
    return %c0_i32, %c0_i32_0 : i32, i32
  }
  func.func @transform_8(%arg0: i32) -> (i32, i32) {
    %c0_i32 = arith.constant 0 : i32
    %c0_i32_0 = arith.constant 0 : i32
    %c0_i32_1 = arith.constant 0 : i32
    return %c0_i32, %c0_i32_0 : i32, i32
  }
  func.func @transform_9(%arg0: i32) -> (i32, i32) {
    %c0_i32 = arith.constant 0 : i32
    %c0_i32_0 = arith.constant 0 : i32
    return %arg0, %c0_i32 : i32, i32
  }
}

</mosaic_0001>

<llo_original>
// kernel: tpu_custom_call.1
$region0: #{tpu_custom_call.1}
  #allocation0 [shape = 'u32[]', space=smem, size = 0x4, offset = 0x4, fixed_abs, tag = 'smem constant byte address 0x4 - core index']
  #allocation1 [shape = 'u32[72,128]{1,0:T(1,128)}', space=vmem, size = 0x9000, scoped, tag = 'internal scratch']
  %s0 = inlined_call_operand.vmem [shape: f32[1024,3], index: 0, kind: input, shape index: {}]
  %s1 = inlined_call_operand.vmem [shape: f32[3,32], index: 1, kind: input, shape index: {}]
  %s2 = inlined_call_operand.vmem [shape: f32[32,32], index: 2, kind: input, shape index: {}]
  %s3 = inlined_call_operand.vmem [shape: f32[32,32], index: 3, kind: input, shape index: {}]
  %s4 = inlined_call_operand.vmem [shape: f32[32,128], index: 4, kind: input, shape index: {}]
  %s5 = inlined_call_operand.vmem [shape: f32[1,32], index: 5, kind: input, shape index: {}]
  %s6 = inlined_call_operand.vmem [shape: f32[1,32], index: 6, kind: input, shape index: {}]
  %s7 = inlined_call_operand.vmem [shape: f32[1,32], index: 7, kind: input, shape index: {}]
  %s8 = inlined_call_operand.vmem [shape: f32[1,128], index: 8, kind: input, shape index: {}]
  %s9 = inlined_call_operand.vmem [shape: f32[1024,3], index: 9, kind: output, shape index: {}]
  %s10 = sld [smem:[#allocation0]]
  $region69: #{tpu_custom_call.1} parent=0
    _
  %s12 = ssub.s32 1, %s10
  %s13 = scalar_select 0, %s12, %s10
  loop: start=0, step=1, limit=6
  $region2: #{tpu_custom_call.1} parent=0 // loop_pre_header
    _
  $region3: #{tpu_custom_call.1} parent=0 // loop_header
    %s15 = sphi 0, %s19
    %p16 = scmp.ge.s32.totalorder %s15, 6
    %s25 = sphi 0, %s27
    %s28 = sphi 0, %s25
    %s29 = sphi 0, %s28
    %s45 = sphi 0, %s29
    %s49 = sphi 0, %s49
    %s51 = sphi 0, %s49
    %s52 = sphi 0, %s51
    %s66 = sphi 0, %s52
    %s70 = sphi 0, %s70
    %s72 = sphi 0, %s70
    %s73 = sphi 0, %s72
    %s87 = sphi 0, %s73
    %s91 = sphi 0, %s91
    %s93 = sphi 0, %s91
    %s94 = sphi 0, %s93
    %s108 = sphi 0, %s94
    %s112 = sphi 0, %s112
    %s114 = sphi 0, %s112
    %s115 = sphi 0, %s114
    %s129 = sphi 0, %s115
    %s133 = sphi 0, %s133
    %s135 = sphi 0, %s133
    %s136 = sphi 0, %s135
    %s150 = sphi 0, %s136
    %s154 = sphi 0, %s154
    %s156 = sphi 0, %s154
    %s157 = sphi 0, %s156
    %s171 = sphi 0, %s157
    %s175 = sphi 0, %s175
    %s177 = sphi 0, %s175
    %s178 = sphi 0, %s177
    %s192 = sphi 0, %s178
    %s196 = sphi 0, %s196
    %s198 = sphi 0, %s196
    %s199 = sphi 0, %s198
    %s213 = sphi 0, %s199
    %s219 = sphi 0, %s221
    %s222 = sphi 0, %s219
    %s223 = sphi 0, %s222
    %s239 = sphi 0, %s223
  $region4: #{tpu_custom_call.1} parent=0 // loop_header_branch
    %18 = sbr.rel (%p16) target = $region8
  $region5: #{tpu_custom_call.1} parent=0 // loop_body
    %s20 = ssub.s32 %s15, 1
    %s21 = ssub.s32 %s15, 2
    %s22 = sadd.s32 %s15, 1
    %s23 = ssub.s32 %s15, %s22
    %p24 = scmp.eq.s32.totalorder %s23, 0
    %s26 = sadd.s32 %s25, 1
    %s27 = scalar_select %p24, %s25, %s26
    %p30 = pneg %p24
    %p31 = scmp.eq.s32.totalorder %s15, 3
    %p32 = por %p30, %p31
    %p33 = scmp.ne.s32.totalorder %s25, %s28
    %p34 = scmp.eq.s32.totalorder %s15, 0
    %p35 = por %p33, %p34
    %p36 = scmp.ne.s32.totalorder %s25, %s28
    %p37 = scmp.eq.s32.totalorder %s20, 3
    %p38 = por %p36, %p37
    %p39 = scmp.ne.s32.totalorder %s28, %s29
    %p40 = scmp.eq.s32.totalorder %s20, 0
    %p41 = por %p39, %p40
    %p42 = scmp.ne.s32.totalorder %s28, %s29
    %p43 = scmp.eq.s32.totalorder %s21, 3
    %p44 = por %p42, %p43
    %p46 = scmp.ne.s32.totalorder %s29, %s45
    %p47 = scmp.eq.s32.totalorder %s21, 0
    %p48 = por %p46, %p47
    %s50 = sadd.s32 %s49, 1
    %p53 = scmp.eq.s32.totalorder %s15, 3
    %p54 = scmp.ne.s32.totalorder %s49, %s51
    %p55 = scmp.eq.s32.totalorder %s15, 0
    %p56 = por %p54, %p55
    %p57 = scmp.ne.s32.totalorder %s49, %s51
    %p58 = scmp.eq.s32.totalorder %s20, 3
    %p59 = por %p57, %p58
    %p60 = scmp.ne.s32.totalorder %s51, %s52
    %p61 = scmp.eq.s32.totalorder %s20, 0
    %p62 = por %p60, %p61
    %p63 = scmp.ne.s32.totalorder %s51, %s52
    %p64 = scmp.eq.s32.totalorder %s21, 3
    %p65 = por %p63, %p64
    %p67 = scmp.ne.s32.totalorder %s52, %s66
    %p68 = scmp.eq.s32.totalorder %s21, 0
    %p69 = por %p67, %p68
    %s71 = sadd.s32 %s70, 1
    %p74 = scmp.eq.s32.totalorder %s15, 3
    %p75 = scmp.ne.s32.totalorder %s70, %s72
    %p76 = scmp.eq.s32.totalorder %s15, 0
    %p77 = por %p75, %p76
    %p78 = scmp.ne.s32.totalorder %s70, %s72
    %p79 = scmp.eq.s32.totalorder %s20, 3
    %p80 = por %p78, %p79
    %p81 = scmp.ne.s32.totalorder %s72, %s73
    %p82 = scmp.eq.s32.totalorder %s20, 0
    %p83 = por %p81, %p82
    %p84 = scmp.ne.s32.totalorder %s72, %s73
    %p85 = scmp.eq.s32.totalorder %s21, 3
    %p86 = por %p84, %p85
    %p88 = scmp.ne.s32.totalorder %s73, %s87
    %p89 = scmp.eq.s32.totalorder %s21, 0
    %p90 = por %p88, %p89
    %s92 = sadd.s32 %s91, 1
    %p95 = scmp.eq.s32.totalorder %s15, 3
    %p96 = scmp.ne.s32.totalorder %s91, %s93
    %p97 = scmp.eq.s32.totalorder %s15, 0
    %p98 = por %p96, %p97
    %p99 = scmp.ne.s32.totalorder %s91, %s93
    %p100 = scmp.eq.s32.totalorder %s20, 3
    %p101 = por %p99, %p100
    %p102 = scmp.ne.s32.totalorder %s93, %s94
    %p103 = scmp.eq.s32.totalorder %s20, 0
    %p104 = por %p102, %p103
    %p105 = scmp.ne.s32.totalorder %s93, %s94
    %p106 = scmp.eq.s32.totalorder %s21, 3
    %p107 = por %p105, %p106
    %p109 = scmp.ne.s32.totalorder %s94, %s108
    %p110 = scmp.eq.s32.totalorder %s21, 0
    %p111 = por %p109, %p110
    %s113 = sadd.s32 %s112, 1
    %p116 = scmp.eq.s32.totalorder %s15, 3
    %p117 = scmp.ne.s32.totalorder %s112, %s114
    %p118 = scmp.eq.s32.totalorder %s15, 0
    %p119 = por %p117, %p118
    %p120 = scmp.ne.s32.totalorder %s112, %s114
    %p121 = scmp.eq.s32.totalorder %s20, 3
    %p122 = por %p120, %p121
    %p123 = scmp.ne.s32.totalorder %s114, %s115
    %p124 = scmp.eq.s32.totalorder %s20, 0
    %p125 = por %p123, %p124
    %p126 = scmp.ne.s32.totalorder %s114, %s115
    %p127 = scmp.eq.s32.totalorder %s21, 3
    %p128 = por %p126, %p127
    %p130 = scmp.ne.s32.totalorder %s115, %s129
    %p131 = scmp.eq.s32.totalorder %s21, 0
    %p132 = por %p130, %p131
    %s134 = sadd.s32 %s133, 1
    %p137 = scmp.eq.s32.totalorder %s15, 3
    %p138 = scmp.ne.s32.totalorder %s133, %s135
    %p139 = scmp.eq.s32.totalorder %s15, 0
    %p140 = por %p138, %p139
    %p141 = scmp.ne.s32.totalorder %s133, %s135
    %p142 = scmp.eq.s32.totalorder %s20, 3
    %p143 = por %p141, %p142
    %p144 = scmp.ne.s32.totalorder %s135, %s136
    %p145 = scmp.eq.s32.totalorder %s20, 0
    %p146 = por %p144, %p145
    %p147 = scmp.ne.s32.totalorder %s135, %s136
    %p148 = scmp.eq.s32.totalorder %s21, 3
    %p149 = por %p147, %p148
    %p151 = scmp.ne.s32.totalorder %s136, %s150
    %p152 = scmp.eq.s32.totalorder %s21, 0
    %p153 = por %p151, %p152
    %s155 = sadd.s32 %s154, 1
    %p158 = scmp.eq.s32.totalorder %s15, 3
    %p159 = scmp.ne.s32.totalorder %s154, %s156
    %p160 = scmp.eq.s32.totalorder %s15, 0
    %p161 = por %p159, %p160
    %p162 = scmp.ne.s32.totalorder %s154, %s156
    %p163 = scmp.eq.s32.totalorder %s20, 3
    %p164 = por %p162, %p163
    %p165 = scmp.ne.s32.totalorder %s156, %s157
    %p166 = scmp.eq.s32.totalorder %s20, 0
    %p167 = por %p165, %p166
    %p168 = scmp.ne.s32.totalorder %s156, %s157
    %p169 = scmp.eq.s32.totalorder %s21, 3
    %p170 = por %p168, %p169
    %p172 = scmp.ne.s32.totalorder %s157, %s171
    %p173 = scmp.eq.s32.totalorder %s21, 0
    %p174 = por %p172, %p173
    %s176 = sadd.s32 %s175, 1
    %p179 = scmp.eq.s32.totalorder %s15, 3
    %p180 = scmp.ne.s32.totalorder %s175, %s177
    %p181 = scmp.eq.s32.totalorder %s15, 0
    %p182 = por %p180, %p181
    %p183 = scmp.ne.s32.totalorder %s175, %s177
    %p184 = scmp.eq.s32.totalorder %s20, 3
    %p185 = por %p183, %p184
    %p186 = scmp.ne.s32.totalorder %s177, %s178
    %p187 = scmp.eq.s32.totalorder %s20, 0
    %p188 = por %p186, %p187
    %p189 = scmp.ne.s32.totalorder %s177, %s178
    %p190 = scmp.eq.s32.totalorder %s21, 3
    %p191 = por %p189, %p190
    %p193 = scmp.ne.s32.totalorder %s178, %s192
    %p194 = scmp.eq.s32.totalorder %s21, 0
    %p195 = por %p193, %p194
    %s197 = sadd.s32 %s196, 1
    %p200 = scmp.eq.s32.totalorder %s15, 3
    %p201 = scmp.ne.s32.totalorder %s196, %s198
    %p202 = scmp.eq.s32.totalorder %s15, 0
    %p203 = por %p201, %p202
    %p204 = scmp.ne.s32.totalorder %s196, %s198
    %p205 = scmp.eq.s32.totalorder %s20, 3
    %p206 = por %p204, %p205
    %p207 = scmp.ne.s32.totalorder %s198, %s199
    %p208 = scmp.eq.s32.totalorder %s20, 0
    %p209 = por %p207, %p208
    %p210 = scmp.ne.s32.totalorder %s198, %s199
    %p211 = scmp.eq.s32.totalorder %s21, 3
    %p212 = por %p210, %p211
    %p214 = scmp.ne.s32.totalorder %s199, %s213
    %p215 = scmp.eq.s32.totalorder %s21, 0
    %p216 = por %p214, %p215
    %s217 = ssub.s32 %s15, %s22
    %p218 = scmp.eq.s32.totalorder %s217, 0
    %s220 = sadd.s32 %s219, 1
    %s221 = scalar_select %p218, %s219, %s220
    %p224 = pneg %p218
    %p225 = scmp.eq.s32.totalorder %s15, 3
    %p226 = por %p224, %p225
    %p227 = scmp.ne.s32.totalorder %s219, %s222
    %p228 = scmp.eq.s32.totalorder %s15, 0
    %p229 = por %p227, %p228
    %p230 = scmp.ne.s32.totalorder %s219, %s222
    %p231 = scmp.eq.s32.totalorder %s20, 3
    %p232 = por %p230, %p231
    %p233 = scmp.ne.s32.totalorder %s222, %s223
    %p234 = scmp.eq.s32.totalorder %s20, 0
    %p235 = por %p233, %p234
    %p236 = scmp.ne.s32.totalorder %s222, %s223
    %p237 = scmp.eq.s32.totalorder %s21, 3
    %p238 = por %p236, %p237
    %p240 = scmp.ne.s32.totalorder %s223, %s239
    %p241 = scmp.eq.s32.totalorder %s21, 0
    %p242 = por %p240, %p241
    %p243 = scmp.le.s32.totalorder 1, %s15
    %p244 = scmp.lt.s32.totalorder %s15, 5
    %p245 = pnand %p243, %p244
    %p246 = pneg %p245
    // Predicated region
    $region9: #{tpu_custom_call.1} parent=5 // pred_check
      _
    $region10: #{tpu_custom_call.1} parent=5 // pred_check_branch
      %248 = sbr.rel (%p245) target = $region12
    $region11: #{tpu_custom_call.1} parent=5 // pred_region
      %s249 = ssub.s32 %s15, 1
      // Predicated region
      $region13: #{tpu_custom_call.1} parent=11 // pred_check
        %p250 = pneg %p62
      $region14: #{tpu_custom_call.1} parent=11 // pred_check_branch
        %252 = sbr.rel (%p250) target = $region16
      $region15: #{tpu_custom_call.1} parent=11 // pred_region
        _
      $region16: #{tpu_custom_call.1} parent=11 // pred_fallthru
        _
      // Predicated region
      $region17: #{tpu_custom_call.1} parent=11 // pred_check
        %p253 = pneg %p83
      $region18: #{tpu_custom_call.1} parent=11 // pred_check_branch
        %255 = sbr.rel (%p253) target = $region20
      $region19: #{tpu_custom_call.1} parent=11 // pred_region
        _
      $region20: #{tpu_custom_call.1} parent=11 // pred_fallthru
        _
      // Predicated region
      $region21: #{tpu_custom_call.1} parent=11 // pred_check
        %p256 = pneg %p104
      $region22: #{tpu_custom_call.1} parent=11 // pred_check_branch
        %258 = sbr.rel (%p256) target = $region24
      $region23: #{tpu_custom_call.1} parent=11 // pred_region
        _
      $region24: #{tpu_custom_call.1} parent=11 // pred_fallthru
        _
      // Predicated region
      $region25: #{tpu_custom_call.1} parent=11 // pred_check
        %p259 = pneg %p125
      $region26: #{tpu_custom_call.1} parent=11 // pred_check_branch
        %261 = sbr.rel (%p259) target = $region28
      $region27: #{tpu_custom_call.1} parent=11 // pred_region
        _
      $region28: #{tpu_custom_call.1} parent=11 // pred_fallthru
        _
      // Predicated region
      $region29: #{tpu_custom_call.1} parent=11 // pred_check
        %p262 = pneg %p146
      $region30: #{tpu_custom_call.1} parent=11 // pred_check_branch
        %264 = sbr.rel (%p262) target = $region32
      $region31: #{tpu_custom_call.1} parent=11 // pred_region
        _
      $region32: #{tpu_custom_call.1} parent=11 // pred_fallthru
        _
      // Predicated region
      $region33: #{tpu_custom_call.1} parent=11 // pred_check
        %p265 = pneg %p167
      $region34: #{tpu_custom_call.1} parent=11 // pred_check_branch
        %267 = sbr.rel (%p265) target = $region36
      $region35: #{tpu_custom_call.1} parent=11 // pred_region
        _
      $region36: #{tpu_custom_call.1} parent=11 // pred_fallthru
        _
      // Predicated region
      $region37: #{tpu_custom_call.1} parent=11 // pred_check
        %p268 = pneg %p188
      $region38: #{tpu_custom_call.1} parent=11 // pred_check_branch
        %270 = sbr.rel (%p268) target = $region40
      $region39: #{tpu_custom_call.1} parent=11 // pred_region
        _
      $region40: #{tpu_custom_call.1} parent=11 // pred_fallthru
        _
      // Predicated region
      $region41: #{tpu_custom_call.1} parent=11 // pred_check
        %p271 = pneg %p209
      $region42: #{tpu_custom_call.1} parent=11 // pred_check_branch
        %273 = sbr.rel (%p271) target = $region44
      $region43: #{tpu_custom_call.1} parent=11 // pred_region
        _
      $region44: #{tpu_custom_call.1} parent=11 // pred_fallthru
        _
    $region12: #{tpu_custom_call.1} parent=5 // pred_fallthru
      _
    %p274 = scmp.lt.s32.totalorder %s15, 4
    // Predicated region
    $region45: #{tpu_custom_call.1} parent=5 // pred_check
      %p275 = pneg %p274
    $region46: #{tpu_custom_call.1} parent=5 // pred_check_branch
      %277 = sbr.rel (%p275) target = $region48
    $region47: #{tpu_custom_call.1} parent=5 // pred_region
      // Predicated region
      $region49: #{tpu_custom_call.1} parent=47 // pred_check
        %p278 = pneg %p35
      $region50: #{tpu_custom_call.1} parent=47 // pred_check_branch
        %280 = sbr.rel (%p278) target = $region52
      $region51: #{tpu_custom_call.1} parent=47 // pred_region
        %s281 = smul.u32 32, %s15
        %p282 = scmp.lt.s32.totalorder %s281, 127
        %s283 = scalar_select %p282, %s281, 127
        %s284 = smul.addr %s283, 8
        %s285 = scalar_lea.vmem %s0, %s284
        %s286 = smul.u32 32, %s15
      $region52: #{tpu_custom_call.1} parent=47 // pred_fallthru
        _
    $region48: #{tpu_custom_call.1} parent=5 // pred_fallthru
      _
    %p287 = scmp.le.s32.totalorder 1, %s15
    %p288 = scmp.lt.s32.totalorder %s15, 5
    %p289 = pnand %p287, %p288
    %p290 = pneg %p289
    // Predicated region
    $region53: #{tpu_custom_call.1} parent=5 // pred_check
      _
    $region54: #{tpu_custom_call.1} parent=5 // pred_check_branch
      %292 = sbr.rel (%p289) target = $region56
    $region55: #{tpu_custom_call.1} parent=5 // pred_region
      %s293 = ssub.s32 %s15, 1
      %s294 = smul.u32 32, %s20
      %p295 = scmp.lt.s32.totalorder %s294, 127
      %s296 = scalar_select %p295, %s294, 127
      %s297 = smul.addr %s296, 8
      %s298 = scalar_lea.vmem %s0, %s297
      %p299 = pneg %p41
      %p300 = pneg %p38
      %p301 = pneg %p62
      %p302 = pneg %p59
      %p303 = pneg %p83
      %p304 = pneg %p80
      %p305 = pneg %p104
      %p306 = pneg %p101
      %p307 = pneg %p125
      %p308 = pneg %p122
      %p309 = pneg %p146
      %p310 = pneg %p143
      %p311 = pneg %p167
      %p312 = pneg %p164
      %p313 = pneg %p188
      %p314 = pneg %p185
      %p315 = pneg %p209
      %p316 = pneg %p206
      %p317 = pneg %p235
      %p318 = pneg %p232
      %s319 = smul.u32 32, %s20
      %p320 = scmp.lt.s32.totalorder %s319, 127
      %s321 = scalar_select %p320, %s319, 127
      %s322 = smul.addr %s321, 8
      %s323 = scalar_lea.vmem %s9, %s322
      %s324 = smul.u32 32, %s20
      %p325 = scmp.lt.s32.totalorder %s324, 127
      %s326 = scalar_select %p325, %s324, 127
      %s327 = smul.addr %s326, 8
      %s328 = scalar_lea.vmem %s0, %s327
      %s329 = smul.u32 32, %s20
      %s330 = smul.u32 32, %s20
      %p331 = scmp.lt.s32.totalorder %s330, 127
      %s332 = scalar_select %p331, %s330, 127
      %s333 = smul.addr %s332, 8
      %s334 = scalar_lea.vmem %s9, %s333
      %s335 = smul.u32 32, %s20
      %v336 = vld [vmem:[%s328] sm:$0xff]
      %v337 = vld [vmem:[%s328 + $0x8] sm:$0xff]
      %v338 = vld [vmem:[%s328 + $0x10] sm:$0xff]
      %v339 = vld [vmem:[%s328 + $0x18] sm:$0xff]
      %v340 = vld [vmem:[%s328 + $0x20] sm:$0xff]
      %v341 = vld [vmem:[%s328 + $0x28] sm:$0xff]
      %v342 = vld [vmem:[%s328 + $0x30] sm:$0xff]
      %v343 = vld [vmem:[%s328 + $0x38] sm:$0xff]
      %v344 = vld [vmem:[%s328 + $0x40] sm:$0xff]
      %v345 = vld [vmem:[%s328 + $0x48] sm:$0xff]
      %v346 = vld [vmem:[%s328 + $0x50] sm:$0xff]
      %v347 = vld [vmem:[%s328 + $0x58] sm:$0xff]
      %v348 = vld [vmem:[%s328 + $0x60] sm:$0xff]
      %v349 = vld [vmem:[%s328 + $0x68] sm:$0xff]
      %v350 = vld [vmem:[%s328 + $0x70] sm:$0xff]
      %v351 = vld [vmem:[%s328 + $0x78] sm:$0xff]
      %v352 = vld [vmem:[%s328 + $0x80] sm:$0xff]
      %v353 = vld [vmem:[%s328 + $0x88] sm:$0xff]
      %v354 = vld [vmem:[%s328 + $0x90] sm:$0xff]
      %v355 = vld [vmem:[%s328 + $0x98] sm:$0xff]
      %v356 = vld [vmem:[%s328 + $0xa0] sm:$0xff]
      %v357 = vld [vmem:[%s328 + $0xa8] sm:$0xff]
      %v358 = vld [vmem:[%s328 + $0xb0] sm:$0xff]
      %v359 = vld [vmem:[%s328 + $0xb8] sm:$0xff]
      %v360 = vld [vmem:[%s328 + $0xc0] sm:$0xff]
      %v361 = vld [vmem:[%s328 + $0xc8] sm:$0xff]
      %v362 = vld [vmem:[%s328 + $0xd0] sm:$0xff]
      %v363 = vld [vmem:[%s328 + $0xd8] sm:$0xff]
      %v364 = vld [vmem:[%s328 + $0xe0] sm:$0xff]
      %v365 = vld [vmem:[%s328 + $0xe8] sm:$0xff]
      %v366 = vld [vmem:[%s328 + $0xf0] sm:$0xff]
      %v367 = vld [vmem:[%s328 + $0xf8] sm:$0xff]
      %v368 = vld [vmem:[%s1] sm:$0x7]
      %v369 = vld [vmem:[%s5] sm:$0x1]
      %v371 = vperm.slane %v369, 0
      %vm373 = vcmask 23552
      %v375 = vsel %vm373, %v336, 0
      %v378 = vsel %vm373, %v337, 0
      %v381 = vsel %vm373, %v338, 0
      %v384 = vsel %vm373, %v339, 0
      %v387 = vsel %vm373, %v340, 0
      %v390 = vsel %vm373, %v341, 0
      %v393 = vsel %vm373, %v342, 0
      %v396 = vsel %vm373, %v343, 0
      %v399 = vsel %vm373, %v344, 0
      %v402 = vsel %vm373, %v345, 0
      %v405 = vsel %vm373, %v346, 0
      %v408 = vsel %vm373, %v347, 0
      %v411 = vsel %vm373, %v348, 0
      %v414 = vsel %vm373, %v349, 0
      %v417 = vsel %vm373, %v350, 0
      %v420 = vsel %vm373, %v351, 0
      %v423 = vsel %vm373, %v352, 0
      %v426 = vsel %vm373, %v353, 0
      %v429 = vsel %vm373, %v354, 0
      %v432 = vsel %vm373, %v355, 0
      %v435 = vsel %vm373, %v356, 0
      %v438 = vsel %vm373, %v357, 0
      %v441 = vsel %vm373, %v358, 0
      %v444 = vsel %vm373, %v359, 0
      %v447 = vsel %vm373, %v360, 0
      %v450 = vsel %vm373, %v361, 0
      %v453 = vsel %vm373, %v362, 0
      %v456 = vsel %vm373, %v363, 0
      %v459 = vsel %vm373, %v364, 0
      %v462 = vsel %vm373, %v365, 0
      %v465 = vsel %vm373, %v366, 0
      %v468 = vsel %vm373, %v367, 0
      %vm470 = vcmask 1042432
      %v472 = vsel %vm470, %v368, 0
      %474 = vmatpush.msra.mxu0 0.0
      %475 = vmatpush.msra.mxu0 0.0
      %476 = vmatpush.msra.mxu0 0.0
      %477 = vmatpush.msra.mxu0 0.0
      %478 = vmatpush.msra.mxu0 0.0
      %479 = vmatpush.msra.mxu0 0.0
      %480 = vmatpush.msra.mxu0 0.0
      %481 = vmatpush.msra.mxu0 0.0
      %482 = vmatpush.msra.mxu0 0.0
      %483 = vmatpush.msra.mxu0 0.0
      %484 = vmatpush.msra.mxu0 0.0
      %485 = vmatpush.msra.mxu0 0.0
      %486 = vmatpush.msra.mxu0 0.0
      %487 = vmatpush.msra.mxu0 0.0
      %488 = vmatpush.msra.mxu0 0.0
      %489 = vmatpush.msra.mxu0 %v472
      %490 = vmatmul.f32.gmra.mxu0 %v375
      %v491 = vpop.f32.mrf.mxu0
      %v492 = vadd.f32 %v371, %v491
      %493 = vmatmul.f32.gmra.mxu0 %v378
      %v494 = vpop.f32.mrf.mxu0
      %v495 = vadd.f32 %v371, %v494
      %496 = vmatmul.f32.gmra.mxu0 %v381
      %v497 = vpop.f32.mrf.mxu0
      %v498 = vadd.f32 %v371, %v497
      %499 = vmatmul.f32.gmra.mxu0 %v384
      %v500 = vpop.f32.mrf.mxu0
      %v501 = vadd.f32 %v371, %v500
      %502 = vmatmul.f32.gmra.mxu0 %v387
      %v503 = vpop.f32.mrf.mxu0
      %v504 = vadd.f32 %v371, %v503
      %505 = vmatmul.f32.gmra.mxu0 %v390
      %v506 = vpop.f32.mrf.mxu0
      %v507 = vadd.f32 %v371, %v506
      %508 = vmatmul.f32.gmra.mxu0 %v393
      %v509 = vpop.f32.mrf.mxu0
      %v510 = vadd.f32 %v371, %v509
      %511 = vmatmul.f32.gmra.mxu0 %v396
      %v512 = vpop.f32.mrf.mxu0
      %v513 = vadd.f32 %v371, %v512
      %514 = vmatmul.f32.gmra.mxu0 %v399
      %v515 = vpop.f32.mrf.mxu0
      %v516 = vadd.f32 %v371, %v515
      %517 = vmatmul.f32.gmra.mxu0 %v402
      %v518 = vpop.f32.mrf.mxu0
      %v519 = vadd.f32 %v371, %v518
      %520 = vmatmul.f32.gmra.mxu0 %v405
      %v521 = vpop.f32.mrf.mxu0
      %v522 = vadd.f32 %v371, %v521
      %523 = vmatmul.f32.gmra.mxu0 %v408
      %v524 = vpop.f32.mrf.mxu0
      %v525 = vadd.f32 %v371, %v524
      %526 = vmatmul.f32.gmra.mxu0 %v411
      %v527 = vpop.f32.mrf.mxu0
      %v528 = vadd.f32 %v371, %v527
      %529 = vmatmul.f32.gmra.mxu0 %v414
      %v530 = vpop.f32.mrf.mxu0
      %v531 = vadd.f32 %v371, %v530
      %532 = vmatmul.f32.gmra.mxu0 %v417
      %v533 = vpop.f32.mrf.mxu0
      %v534 = vadd.f32 %v371, %v533
      %535 = vmatmul.f32.gmra.mxu0 %v420
      %v536 = vpop.f32.mrf.mxu0
      %v537 = vadd.f32 %v371, %v536
      %538 = vmatmul.f32.gmra.mxu0 %v423
      %v539 = vpop.f32.mrf.mxu0
      %v540 = vadd.f32 %v371, %v539
      %541 = vmatmul.f32.gmra.mxu0 %v426
      %v542 = vpop.f32.mrf.mxu0
      %v543 = vadd.f32 %v371, %v542
      %544 = vmatmul.f32.gmra.mxu0 %v429
      %v545 = vpop.f32.mrf.mxu0
      %v546 = vadd.f32 %v371, %v545
      %547 = vmatmul.f32.gmra.mxu0 %v432
      %v548 = vpop.f32.mrf.mxu0
      %v549 = vadd.f32 %v371, %v548
      %550 = vmatmul.f32.gmra.mxu0 %v435
      %v551 = vpop.f32.mrf.mxu0
      %v552 = vadd.f32 %v371, %v551
      %553 = vmatmul.f32.gmra.mxu0 %v438
      %v554 = vpop.f32.mrf.mxu0
      %v555 = vadd.f32 %v371, %v554
      %556 = vmatmul.f32.gmra.mxu0 %v441
      %v557 = vpop.f32.mrf.mxu0
      %v558 = vadd.f32 %v371, %v557
      %559 = vmatmul.f32.gmra.mxu0 %v444
      %v560 = vpop.f32.mrf.mxu0
      %v561 = vadd.f32 %v371, %v560
      %562 = vmatmul.f32.gmra.mxu0 %v447
      %v563 = vpop.f32.mrf.mxu0
      %v564 = vadd.f32 %v371, %v563
      %565 = vmatmul.f32.gmra.mxu0 %v450
      %v566 = vpop.f32.mrf.mxu0
      %v567 = vadd.f32 %v371, %v566
      %568 = vmatmul.f32.gmra.mxu0 %v453
      %v569 = vpop.f32.mrf.mxu0
      %v570 = vadd.f32 %v371, %v569
      %571 = vmatmul.f32.gmra.mxu0 %v456
      %v572 = vpop.f32.mrf.mxu0
      %v573 = vadd.f32 %v371, %v572
      %574 = vmatmul.f32.gmra.mxu0 %v459
      %v575 = vpop.f32.mrf.mxu0
      %v576 = vadd.f32 %v371, %v575
      %577 = vmatmul.f32.gmra.mxu0 %v462
      %v578 = vpop.f32.mrf.mxu0
      %v579 = vadd.f32 %v371, %v578
      %580 = vmatmul.f32.gmra.mxu0 %v465
      %v581 = vpop.f32.mrf.mxu0
      %v582 = vadd.f32 %v371, %v581
      %583 = vmatmul.f32.gmra.mxu0 %v468
      %v584 = vpop.f32.mrf.mxu0
      %v585 = vadd.f32 %v371, %v584
      %586 = vdwg.mxu0
      %vm587 = vcmp.gt.f32.partialorder %v492, 0.0
      %vm588 = vcmp.gt.f32.partialorder %v495, 0.0
      %vm589 = vcmp.gt.f32.partialorder %v498, 0.0
      %vm590 = vcmp.gt.f32.partialorder %v501, 0.0
      %vm591 = vcmp.gt.f32.partialorder %v504, 0.0
      %vm592 = vcmp.gt.f32.partialorder %v507, 0.0
      %vm593 = vcmp.gt.f32.partialorder %v510, 0.0
      %vm594 = vcmp.gt.f32.partialorder %v513, 0.0
      %vm595 = vcmp.gt.f32.partialorder %v516, 0.0
      %vm596 = vcmp.gt.f32.partialorder %v519, 0.0
      %vm597 = vcmp.gt.f32.partialorder %v522, 0.0
      %vm598 = vcmp.gt.f32.partialorder %v525, 0.0
      %vm599 = vcmp.gt.f32.partialorder %v528, 0.0
      %vm600 = vcmp.gt.f32.partialorder %v531, 0.0
      %vm601 = vcmp.gt.f32.partialorder %v534, 0.0
      %vm602 = vcmp.gt.f32.partialorder %v537, 0.0
      %vm603 = vcmp.gt.f32.partialorder %v540, 0.0
      %vm604 = vcmp.gt.f32.partialorder %v543, 0.0
      %vm605 = vcmp.gt.f32.partialorder %v546, 0.0
      %vm606 = vcmp.gt.f32.partialorder %v549, 0.0
      %vm607 = vcmp.gt.f32.partialorder %v552, 0.0
      %vm608 = vcmp.gt.f32.partialorder %v555, 0.0
      %vm609 = vcmp.gt.f32.partialorder %v558, 0.0
      %vm610 = vcmp.gt.f32.partialorder %v561, 0.0
      %vm611 = vcmp.gt.f32.partialorder %v564, 0.0
      %vm612 = vcmp.gt.f32.partialorder %v567, 0.0
      %vm613 = vcmp.gt.f32.partialorder %v570, 0.0
      %vm614 = vcmp.gt.f32.partialorder %v573, 0.0
      %vm615 = vcmp.gt.f32.partialorder %v576, 0.0
      %vm616 = vcmp.gt.f32.partialorder %v579, 0.0
      %vm617 = vcmp.gt.f32.partialorder %v582, 0.0
      %vm618 = vcmp.gt.f32.partialorder %v585, 0.0
      %v619 = vmul.f32 %v492, 0.01
      %v620 = vmul.f32 %v495, 0.01
      %v621 = vmul.f32 %v498, 0.01
      %v622 = vmul.f32 %v501, 0.01
      %v623 = vmul.f32 %v504, 0.01
      %v624 = vmul.f32 %v507, 0.01
      %v625 = vmul.f32 %v510, 0.01
      %v626 = vmul.f32 %v513, 0.01
      %v627 = vmul.f32 %v516, 0.01
      %v628 = vmul.f32 %v519, 0.01
      %v629 = vmul.f32 %v522, 0.01
      %v630 = vmul.f32 %v525, 0.01
      %v631 = vmul.f32 %v528, 0.01
      %v632 = vmul.f32 %v531, 0.01
      %v633 = vmul.f32 %v534, 0.01
      %v634 = vmul.f32 %v537, 0.01
      %v635 = vmul.f32 %v540, 0.01
      %v636 = vmul.f32 %v543, 0.01
      %v637 = vmul.f32 %v546, 0.01
      %v638 = vmul.f32 %v549, 0.01
      %v639 = vmul.f32 %v552, 0.01
      %v640 = vmul.f32 %v555, 0.01
      %v641 = vmul.f32 %v558, 0.01
      %v642 = vmul.f32 %v561, 0.01
      %v643 = vmul.f32 %v564, 0.01
      %v644 = vmul.f32 %v567, 0.01
      %v645 = vmul.f32 %v570, 0.01
      %v646 = vmul.f32 %v573, 0.01
      %v647 = vmul.f32 %v576, 0.01
      %v648 = vmul.f32 %v579, 0.01
      %v649 = vmul.f32 %v582, 0.01
      %v650 = vmul.f32 %v585, 0.01
      %v651 = vsel %vm587, %v492, %v619
      %v652 = vsel %vm588, %v495, %v620
      %v653 = vsel %vm589, %v498, %v621
      %v654 = vsel %vm590, %v501, %v622
      %v655 = vsel %vm591, %v504, %v623
      %v656 = vsel %vm592, %v507, %v624
      %v657 = vsel %vm593, %v510, %v625
      %v658 = vsel %vm594, %v513, %v626
      %v659 = vsel %vm595, %v516, %v627
      %v660 = vsel %vm596, %v519, %v628
      %v661 = vsel %vm597, %v522, %v629
      %v662 = vsel %vm598, %v525, %v630
      %v663 = vsel %vm599, %v528, %v631
      %v664 = vsel %vm600, %v531, %v632
      %v665 = vsel %vm601, %v534, %v633
      %v666 = vsel %vm602, %v537, %v634
      %v667 = vsel %vm603, %v540, %v635
      %v668 = vsel %vm604, %v543, %v636
      %v669 = vsel %vm605, %v546, %v637
      %v670 = vsel %vm606, %v549, %v638
      %v671 = vsel %vm607, %v552, %v639
      %v672 = vsel %vm608, %v555, %v640
      %v673 = vsel %vm609, %v558, %v641
      %v674 = vsel %vm610, %v561, %v642
      %v675 = vsel %vm611, %v564, %v643
      %v676 = vsel %vm612, %v567, %v644
      %v677 = vsel %vm613, %v570, %v645
      %v678 = vsel %vm614, %v573, %v646
      %v679 = vsel %vm615, %v576, %v647
      %v680 = vsel %vm616, %v579, %v648
      %v681 = vsel %vm617, %v582, %v649
      %v682 = vsel %vm618, %v585, %v650
      %v683 = vld [vmem:[%s2] sm:$0xff]
      %v684 = vld [vmem:[%s2 + $0x8] sm:$0xff]
      %v685 = vld [vmem:[%s2 + $0x10] sm:$0xff]
      %v686 = vld [vmem:[%s2 + $0x18] sm:$0xff]
      %v687 = vld [vmem:[%s6] sm:$0x1]
      %v689 = vperm.slane %v687, 0
      %vm691 = vcmask 261120
      %v693 = vsel %vm691, %v651, 0
      %v696 = vsel %vm691, %v652, 0
      %v699 = vsel %vm691, %v653, 0
      %v702 = vsel %vm691, %v654, 0
      %v705 = vsel %vm691, %v655, 0
      %v708 = vsel %vm691, %v656, 0
      %v711 = vsel %vm691, %v657, 0
      %v714 = vsel %vm691, %v658, 0
      %v717 = vsel %vm691, %v659, 0
      %v720 = vsel %vm691, %v660, 0
      %v723 = vsel %vm691, %v661, 0
      %v726 = vsel %vm691, %v662, 0
      %v729 = vsel %vm691, %v663, 0
      %v732 = vsel %vm691, %v664, 0
      %v735 = vsel %vm691, %v665, 0
      %v738 = vsel %vm691, %v666, 0
      %v741 = vsel %vm691, %v667, 0
      %v744 = vsel %vm691, %v668, 0
      %v747 = vsel %vm691, %v669, 0
      %v750 = vsel %vm691, %v670, 0
      %v753 = vsel %vm691, %v671, 0
      %v756 = vsel %vm691, %v672, 0
      %v759 = vsel %vm691, %v673, 0
      %v762 = vsel %vm691, %v674, 0
      %v765 = vsel %vm691, %v675, 0
      %v768 = vsel %vm691, %v676, 0
      %v771 = vsel %vm691, %v677, 0
      %v774 = vsel %vm691, %v678, 0
      %v777 = vsel %vm691, %v679, 0
      %v780 = vsel %vm691, %v680, 0
      %v783 = vsel %vm691, %v681, 0
      %v786 = vsel %vm691, %v682, 0
      %788 = vmatpush.msra.mxu0 0.0
      %789 = vmatpush.msra.mxu0 0.0
      %790 = vmatpush.msra.mxu0 0.0
      %791 = vmatpush.msra.mxu0 0.0
      %792 = vmatpush.msra.mxu0 0.0
      %793 = vmatpush.msra.mxu0 0.0
      %794 = vmatpush.msra.mxu0 0.0
      %795 = vmatpush.msra.mxu0 0.0
      %796 = vmatpush.msra.mxu0 0.0
      %797 = vmatpush.msra.mxu0 0.0
      %798 = vmatpush.msra.mxu0 0.0
      %799 = vmatpush.msra.mxu0 0.0
      %800 = vmatpush.msra.mxu0 %v686
      %801 = vmatpush.msra.mxu0 %v685
      %802 = vmatpush.msra.mxu0 %v684
      %803 = vmatpush.msra.mxu0 %v683
      %804 = vmatmul.f32.gmra.mxu0 %v693
      %v805 = vpop.f32.mrf.mxu0
      %v806 = vadd.f32 %v689, %v805
      %807 = vmatmul.f32.gmra.mxu0 %v696
      %v808 = vpop.f32.mrf.mxu0
      %v809 = vadd.f32 %v689, %v808
      %810 = vmatmul.f32.gmra.mxu0 %v699
      %v811 = vpop.f32.mrf.mxu0
      %v812 = vadd.f32 %v689, %v811
      %813 = vmatmul.f32.gmra.mxu0 %v702
      %v814 = vpop.f32.mrf.mxu0
      %v815 = vadd.f32 %v689, %v814
      %816 = vmatmul.f32.gmra.mxu0 %v705
      %v817 = vpop.f32.mrf.mxu0
      %v818 = vadd.f32 %v689, %v817
      %819 = vmatmul.f32.gmra.mxu0 %v708
      %v820 = vpop.f32.mrf.mxu0
      %v821 = vadd.f32 %v689, %v820
      %822 = vmatmul.f32.gmra.mxu0 %v711
      %v823 = vpop.f32.mrf.mxu0
      %v824 = vadd.f32 %v689, %v823
      %825 = vmatmul.f32.gmra.mxu0 %v714
      %v826 = vpop.f32.mrf.mxu0
      %v827 = vadd.f32 %v689, %v826
      %828 = vmatmul.f32.gmra.mxu0 %v717
      %v829 = vpop.f32.mrf.mxu0
      %v830 = vadd.f32 %v689, %v829
      %831 = vmatmul.f32.gmra.mxu0 %v720
      %v832 = vpop.f32.mrf.mxu0
      %v833 = vadd.f32 %v689, %v832
      %834 = vmatmul.f32.gmra.mxu0 %v723
      %v835 = vpop.f32.mrf.mxu0
      %v836 = vadd.f32 %v689, %v835
      %837 = vmatmul.f32.gmra.mxu0 %v726
      %v838 = vpop.f32.mrf.mxu0
      %v839 = vadd.f32 %v689, %v838
      %840 = vmatmul.f32.gmra.mxu0 %v729
      %v841 = vpop.f32.mrf.mxu0
      %v842 = vadd.f32 %v689, %v841
      %843 = vmatmul.f32.gmra.mxu0 %v732
      %v844 = vpop.f32.mrf.mxu0
      %v845 = vadd.f32 %v689, %v844
      %846 = vmatmul.f32.gmra.mxu0 %v735
      %v847 = vpop.f32.mrf.mxu0
      %v848 = vadd.f32 %v689, %v847
      %849 = vmatmul.f32.gmra.mxu0 %v738
      %v850 = vpop.f32.mrf.mxu0
      %v851 = vadd.f32 %v689, %v850
      %852 = vmatmul.f32.gmra.mxu0 %v741
      %v853 = vpop.f32.mrf.mxu0
      %v854 = vadd.f32 %v689, %v853
      %855 = vmatmul.f32.gmra.mxu0 %v744
      %v856 = vpop.f32.mrf.mxu0
      %v857 = vadd.f32 %v689, %v856
      %858 = vmatmul.f32.gmra.mxu0 %v747
      %v859 = vpop.f32.mrf.mxu0
      %v860 = vadd.f32 %v689, %v859
      %861 = vmatmul.f32.gmra.mxu0 %v750
      %v862 = vpop.f32.mrf.mxu0
      %v863 = vadd.f32 %v689, %v862
      %864 = vmatmul.f32.gmra.mxu0 %v753
      %v865 = vpop.f32.mrf.mxu0
      %v866 = vadd.f32 %v689, %v865
      %867 = vmatmul.f32.gmra.mxu0 %v756
      %v868 = vpop.f32.mrf.mxu0
      %v869 = vadd.f32 %v689, %v868
      %870 = vmatmul.f32.gmra.mxu0 %v759
      %v871 = vpop.f32.mrf.mxu0
      %v872 = vadd.f32 %v689, %v871
      %873 = vmatmul.f32.gmra.mxu0 %v762
      %v874 = vpop.f32.mrf.mxu0
      %v875 = vadd.f32 %v689, %v874
      %876 = vmatmul.f32.gmra.mxu0 %v765
      %v877 = vpop.f32.mrf.mxu0
      %v878 = vadd.f32 %v689, %v877
      %879 = vmatmul.f32.gmra.mxu0 %v768
      %v880 = vpop.f32.mrf.mxu0
      %v881 = vadd.f32 %v689, %v880
      %882 = vmatmul.f32.gmra.mxu0 %v771
      %v883 = vpop.f32.mrf.mxu0
      %v884 = vadd.f32 %v689, %v883
      %885 = vmatmul.f32.gmra.mxu0 %v774
      %v886 = vpop.f32.mrf.mxu0
      %v887 = vadd.f32 %v689, %v886
      %888 = vmatmul.f32.gmra.mxu0 %v777
      %v889 = vpop.f32.mrf.mxu0
      %v890 = vadd.f32 %v689, %v889
      %891 = vmatmul.f32.gmra.mxu0 %v780
      %v892 = vpop.f32.mrf.mxu0
      %v893 = vadd.f32 %v689, %v892
      %894 = vmatmul.f32.gmra.mxu0 %v783
      %v895 = vpop.f32.mrf.mxu0
      %v896 = vadd.f32 %v689, %v895
      %897 = vmatmul.f32.gmra.mxu0 %v786
      %v898 = vpop.f32.mrf.mxu0
      %v899 = vadd.f32 %v689, %v898
      %900 = vdwg.mxu0
      %vm901 = vcmp.gt.f32.partialorder %v806, 0.0
      %vm902 = vcmp.gt.f32.partialorder %v809, 0.0
      %vm903 = vcmp.gt.f32.partialorder %v812, 0.0
      %vm904 = vcmp.gt.f32.partialorder %v815, 0.0
      %vm905 = vcmp.gt.f32.partialorder %v818, 0.0
      %vm906 = vcmp.gt.f32.partialorder %v821, 0.0
      %vm907 = vcmp.gt.f32.partialorder %v824, 0.0
      %vm908 = vcmp.gt.f32.partialorder %v827, 0.0
      %vm909 = vcmp.gt.f32.partialorder %v830, 0.0
      %vm910 = vcmp.gt.f32.partialorder %v833, 0.0
      %vm911 = vcmp.gt.f32.partialorder %v836, 0.0
      %vm912 = vcmp.gt.f32.partialorder %v839, 0.0
      %vm913 = vcmp.gt.f32.partialorder %v842, 0.0
      %vm914 = vcmp.gt.f32.partialorder %v845, 0.0
      %vm915 = vcmp.gt.f32.partialorder %v848, 0.0
      %vm916 = vcmp.gt.f32.partialorder %v851, 0.0
      %vm917 = vcmp.gt.f32.partialorder %v854, 0.0
      %vm918 = vcmp.gt.f32.partialorder %v857, 0.0
      %vm919 = vcmp.gt.f32.partialorder %v860, 0.0
      %vm920 = vcmp.gt.f32.partialorder %v863, 0.0
      %vm921 = vcmp.gt.f32.partialorder %v866, 0.0
      %vm922 = vcmp.gt.f32.partialorder %v869, 0.0
      %vm923 = vcmp.gt.f32.partialorder %v872, 0.0
      %vm924 = vcmp.gt.f32.partialorder %v875, 0.0
      %vm925 = vcmp.gt.f32.partialorder %v878, 0.0
      %vm926 = vcmp.gt.f32.partialorder %v881, 0.0
      %vm927 = vcmp.gt.f32.partialorder %v884, 0.0
      %vm928 = vcmp.gt.f32.partialorder %v887, 0.0
      %vm929 = vcmp.gt.f32.partialorder %v890, 0.0
      %vm930 = vcmp.gt.f32.partialorder %v893, 0.0
      %vm931 = vcmp.gt.f32.partialorder %v896, 0.0
      %vm932 = vcmp.gt.f32.partialorder %v899, 0.0
      %v933 = vmul.f32 %v806, 0.01
      %v934 = vmul.f32 %v809, 0.01
      %v935 = vmul.f32 %v812, 0.01
      %v936 = vmul.f32 %v815, 0.01
      %v937 = vmul.f32 %v818, 0.01
      %v938 = vmul.f32 %v821, 0.01
      %v939 = vmul.f32 %v824, 0.01
      %v940 = vmul.f32 %v827, 0.01
      %v941 = vmul.f32 %v830, 0.01
      %v942 = vmul.f32 %v833, 0.01
      %v943 = vmul.f32 %v836, 0.01
      %v944 = vmul.f32 %v839, 0.01
      %v945 = vmul.f32 %v842, 0.01
      %v946 = vmul.f32 %v845, 0.01
      %v947 = vmul.f32 %v848, 0.01
      %v948 = vmul.f32 %v851, 0.01
      %v949 = vmul.f32 %v854, 0.01
      %v950 = vmul.f32 %v857, 0.01
      %v951 = vmul.f32 %v860, 0.01
      %v952 = vmul.f32 %v863, 0.01
      %v953 = vmul.f32 %v866, 0.01
      %v954 = vmul.f32 %v869, 0.01
      %v955 = vmul.f32 %v872, 0.01
      %v956 = vmul.f32 %v875, 0.01
      %v957 = vmul.f32 %v878, 0.01
      %v958 = vmul.f32 %v881, 0.01
      %v959 = vmul.f32 %v884, 0.01
      %v960 = vmul.f32 %v887, 0.01
      %v961 = vmul.f32 %v890, 0.01
      %v962 = vmul.f32 %v893, 0.01
      %v963 = vmul.f32 %v896, 0.01
      %v964 = vmul.f32 %v899, 0.01
      %v965 = vsel %vm901, %v806, %v933
      %v966 = vsel %vm902, %v809, %v934
      %v967 = vsel %vm903, %v812, %v935
      %v968 = vsel %vm904, %v815, %v936
      %v969 = vsel %vm905, %v818, %v937
      %v970 = vsel %vm906, %v821, %v938
      %v971 = vsel %vm907, %v824, %v939
      %v972 = vsel %vm908, %v827, %v940
      %v973 = vsel %vm909, %v830, %v941
      %v974 = vsel %vm910, %v833, %v942
      %v975 = vsel %vm911, %v836, %v943
      %v976 = vsel %vm912, %v839, %v944
      %v977 = vsel %vm913, %v842, %v945
      %v978 = vsel %vm914, %v845, %v946
      %v979 = vsel %vm915, %v848, %v947
      %v980 = vsel %vm916, %v851, %v948
      %v981 = vsel %vm917, %v854, %v949
      %v982 = vsel %vm918, %v857, %v950
      %v983 = vsel %vm919, %v860, %v951
      %v984 = vsel %vm920, %v863, %v952
      %v985 = vsel %vm921, %v866, %v953
      %v986 = vsel %vm922, %v869, %v954
      %v987 = vsel %vm923, %v872, %v955
      %v988 = vsel %vm924, %v875, %v956
      %v989 = vsel %vm925, %v878, %v957
      %v990 = vsel %vm926, %v881, %v958
      %v991 = vsel %vm927, %v884, %v959
      %v992 = vsel %vm928, %v887, %v960
      %v993 = vsel %vm929, %v890, %v961
      %v994 = vsel %vm930, %v893, %v962
      %v995 = vsel %vm931, %v896, %v963
      %v996 = vsel %vm932, %v899, %v964
      %v997 = vld [vmem:[%s3] sm:$0xff]
      %v998 = vld [vmem:[%s3 + $0x8] sm:$0xff]
      %v999 = vld [vmem:[%s3 + $0x10] sm:$0xff]
      %v1000 = vld [vmem:[%s3 + $0x18] sm:$0xff]
      %v1001 = vld [vmem:[%s7] sm:$0x1]
      %v1003 = vperm.slane %v1001, 0
      %v1006 = vsel %vm691, %v965, 0
      %v1009 = vsel %vm691, %v966, 0
      %v1012 = vsel %vm691, %v967, 0
      %v1015 = vsel %vm691, %v968, 0
      %v1018 = vsel %vm691, %v969, 0
      %v1021 = vsel %vm691, %v970, 0
      %v1024 = vsel %vm691, %v971, 0
      %v1027 = vsel %vm691, %v972, 0
      %v1030 = vsel %vm691, %v973, 0
      %v1033 = vsel %vm691, %v974, 0
      %v1036 = vsel %vm691, %v975, 0
      %v1039 = vsel %vm691, %v976, 0
      %v1042 = vsel %vm691, %v977, 0
      %v1045 = vsel %vm691, %v978, 0
      %v1048 = vsel %vm691, %v979, 0
      %v1051 = vsel %vm691, %v980, 0
      %v1054 = vsel %vm691, %v981, 0
      %v1057 = vsel %vm691, %v982, 0
      %v1060 = vsel %vm691, %v983, 0
      %v1063 = vsel %vm691, %v984, 0
      %v1066 = vsel %vm691, %v985, 0
      %v1069 = vsel %vm691, %v986, 0
      %v1072 = vsel %vm691, %v987, 0
      %v1075 = vsel %vm691, %v988, 0
      %v1078 = vsel %vm691, %v989, 0
      %v1081 = vsel %vm691, %v990, 0
      %v1084 = vsel %vm691, %v991, 0
      %v1087 = vsel %vm691, %v992, 0
      %v1090 = vsel %vm691, %v993, 0
      %v1093 = vsel %vm691, %v994, 0
      %v1096 = vsel %vm691, %v995, 0
      %v1099 = vsel %vm691, %v996, 0
      %1101 = vmatpush.msra.mxu0 0.0
      %1102 = vmatpush.msra.mxu0 0.0
      %1103 = vmatpush.msra.mxu0 0.0
      %1104 = vmatpush.msra.mxu0 0.0
      %1105 = vmatpush.msra.mxu0 0.0
      %1106 = vmatpush.msra.mxu0 0.0
      %1107 = vmatpush.msra.mxu0 0.0
      %1108 = vmatpush.msra.mxu0 0.0
      %1109 = vmatpush.msra.mxu0 0.0
      %1110 = vmatpush.msra.mxu0 0.0
      %1111 = vmatpush.msra.mxu0 0.0
      %1112 = vmatpush.msra.mxu0 0.0
      %1113 = vmatpush.msra.mxu0 %v1000
      %1114 = vmatpush.msra.mxu0 %v999
      %1115 = vmatpush.msra.mxu0 %v998
      %1116 = vmatpush.msra.mxu0 %v997
      %1117 = vmatmul.f32.gmra.mxu0 %v1006
      %v1118 = vpop.f32.mrf.mxu0
      %v1119 = vadd.f32 %v1003, %v1118
      %1120 = vmatmul.f32.gmra.mxu0 %v1009
      %v1121 = vpop.f32.mrf.mxu0
      %v1122 = vadd.f32 %v1003, %v1121
      %1123 = vmatmul.f32.gmra.mxu0 %v1012
      %v1124 = vpop.f32.mrf.mxu0
      %v1125 = vadd.f32 %v1003, %v1124
      %1126 = vmatmul.f32.gmra.mxu0 %v1015
      %v1127 = vpop.f32.mrf.mxu0
      %v1128 = vadd.f32 %v1003, %v1127
      %1129 = vmatmul.f32.gmra.mxu0 %v1018
      %v1130 = vpop.f32.mrf.mxu0
      %v1131 = vadd.f32 %v1003, %v1130
      %1132 = vmatmul.f32.gmra.mxu0 %v1021
      %v1133 = vpop.f32.mrf.mxu0
      %v1134 = vadd.f32 %v1003, %v1133
      %1135 = vmatmul.f32.gmra.mxu0 %v1024
      %v1136 = vpop.f32.mrf.mxu0
      %v1137 = vadd.f32 %v1003, %v1136
      %1138 = vmatmul.f32.gmra.mxu0 %v1027
      %v1139 = vpop.f32.mrf.mxu0
      %v1140 = vadd.f32 %v1003, %v1139
      %1141 = vmatmul.f32.gmra.mxu0 %v1030
      %v1142 = vpop.f32.mrf.mxu0
      %v1143 = vadd.f32 %v1003, %v1142
      %1144 = vmatmul.f32.gmra.mxu0 %v1033
      %v1145 = vpop.f32.mrf.mxu0
      %v1146 = vadd.f32 %v1003, %v1145
      %1147 = vmatmul.f32.gmra.mxu0 %v1036
      %v1148 = vpop.f32.mrf.mxu0
      %v1149 = vadd.f32 %v1003, %v1148
      %1150 = vmatmul.f32.gmra.mxu0 %v1039
      %v1151 = vpop.f32.mrf.mxu0
      %v1152 = vadd.f32 %v1003, %v1151
      %1153 = vmatmul.f32.gmra.mxu0 %v1042
      %v1154 = vpop.f32.mrf.mxu0
      %v1155 = vadd.f32 %v1003, %v1154
      %1156 = vmatmul.f32.gmra.mxu0 %v1045
      %v1157 = vpop.f32.mrf.mxu0
      %v1158 = vadd.f32 %v1003, %v1157
      %1159 = vmatmul.f32.gmra.mxu0 %v1048
      %v1160 = vpop.f32.mrf.mxu0
      %v1161 = vadd.f32 %v1003, %v1160
      %1162 = vmatmul.f32.gmra.mxu0 %v1051
      %v1163 = vpop.f32.mrf.mxu0
      %v1164 = vadd.f32 %v1003, %v1163
      %1165 = vmatmul.f32.gmra.mxu0 %v1054
      %v1166 = vpop.f32.mrf.mxu0
      %v1167 = vadd.f32 %v1003, %v1166
      %1168 = vmatmul.f32.gmra.mxu0 %v1057
      %v1169 = vpop.f32.mrf.mxu0
      %v1170 = vadd.f32 %v1003, %v1169
      %1171 = vmatmul.f32.gmra.mxu0 %v1060
      %v1172 = vpop.f32.mrf.mxu0
      %v1173 = vadd.f32 %v1003, %v1172
      %1174 = vmatmul.f32.gmra.mxu0 %v1063
      %v1175 = vpop.f32.mrf.mxu0
      %v1176 = vadd.f32 %v1003, %v1175
      %1177 = vmatmul.f32.gmra.mxu0 %v1066
      %v1178 = vpop.f32.mrf.mxu0
      %v1179 = vadd.f32 %v1003, %v1178
      %1180 = vmatmul.f32.gmra.mxu0 %v1069
      %v1181 = vpop.f32.mrf.mxu0
      %v1182 = vadd.f32 %v1003, %v1181
      %1183 = vmatmul.f32.gmra.mxu0 %v1072
      %v1184 = vpop.f32.mrf.mxu0
      %v1185 = vadd.f32 %v1003, %v1184
      %1186 = vmatmul.f32.gmra.mxu0 %v1075
      %v1187 = vpop.f32.mrf.mxu0
      %v1188 = vadd.f32 %v1003, %v1187
      %1189 = vmatmul.f32.gmra.mxu0 %v1078
      %v1190 = vpop.f32.mrf.mxu0
      %v1191 = vadd.f32 %v1003, %v1190
      %1192 = vmatmul.f32.gmra.mxu0 %v1081
      %v1193 = vpop.f32.mrf.mxu0
      %v1194 = vadd.f32 %v1003, %v1193
      %1195 = vmatmul.f32.gmra.mxu0 %v1084
      %v1196 = vpop.f32.mrf.mxu0
      %v1197 = vadd.f32 %v1003, %v1196
      %1198 = vmatmul.f32.gmra.mxu0 %v1087
      %v1199 = vpop.f32.mrf.mxu0
      %v1200 = vadd.f32 %v1003, %v1199
      %1201 = vmatmul.f32.gmra.mxu0 %v1090
      %v1202 = vpop.f32.mrf.mxu0
      %v1203 = vadd.f32 %v1003, %v1202
      %1204 = vmatmul.f32.gmra.mxu0 %v1093
      %v1205 = vpop.f32.mrf.mxu0
      %v1206 = vadd.f32 %v1003, %v1205
      %1207 = vmatmul.f32.gmra.mxu0 %v1096
      %v1208 = vpop.f32.mrf.mxu0
      %v1209 = vadd.f32 %v1003, %v1208
      %1210 = vmatmul.f32.gmra.mxu0 %v1099
      %v1211 = vpop.f32.mrf.mxu0
      %v1212 = vadd.f32 %v1003, %v1211
      %1213 = vdwg.mxu0
      %vm1214 = vcmp.gt.f32.partialorder %v1119, 0.0
      %vm1215 = vcmp.gt.f32.partialorder %v1122, 0.0
      %vm1216 = vcmp.gt.f32.partialorder %v1125, 0.0
      %vm1217 = vcmp.gt.f32.partialorder %v1128, 0.0
      %vm1218 = vcmp.gt.f32.partialorder %v1131, 0.0
      %vm1219 = vcmp.gt.f32.partialorder %v1134, 0.0
      %vm1220 = vcmp.gt.f32.partialorder %v1137, 0.0
      %vm1221 = vcmp.gt.f32.partialorder %v1140, 0.0
      %vm1222 = vcmp.gt.f32.partialorder %v1143, 0.0
      %vm1223 = vcmp.gt.f32.partialorder %v1146, 0.0
      %vm1224 = vcmp.gt.f32.partialorder %v1149, 0.0
      %vm1225 = vcmp.gt.f32.partialorder %v1152, 0.0
      %vm1226 = vcmp.gt.f32.partialorder %v1155, 0.0
      %vm1227 = vcmp.gt.f32.partialorder %v1158, 0.0
      %vm1228 = vcmp.gt.f32.partialorder %v1161, 0.0
      %vm1229 = vcmp.gt.f32.partialorder %v1164, 0.0
      %vm1230 = vcmp.gt.f32.partialorder %v1167, 0.0
      %vm1231 = vcmp.gt.f32.partialorder %v1170, 0.0
      %vm1232 = vcmp.gt.f32.partialorder %v1173, 0.0
      %vm1233 = vcmp.gt.f32.partialorder %v1176, 0.0
      %vm1234 = vcmp.gt.f32.partialorder %v1179, 0.0
      %vm1235 = vcmp.gt.f32.partialorder %v1182, 0.0
      %vm1236 = vcmp.gt.f32.partialorder %v1185, 0.0
      %vm1237 = vcmp.gt.f32.partialorder %v1188, 0.0
      %vm1238 = vcmp.gt.f32.partialorder %v1191, 0.0
      %vm1239 = vcmp.gt.f32.partialorder %v1194, 0.0
      %vm1240 = vcmp.gt.f32.partialorder %v1197, 0.0
      %vm1241 = vcmp.gt.f32.partialorder %v1200, 0.0
      %vm1242 = vcmp.gt.f32.partialorder %v1203, 0.0
      %vm1243 = vcmp.gt.f32.partialorder %v1206, 0.0
      %vm1244 = vcmp.gt.f32.partialorder %v1209, 0.0
      %vm1245 = vcmp.gt.f32.partialorder %v1212, 0.0
      %v1246 = vmul.f32 %v1119, 0.01
      %v1247 = vmul.f32 %v1122, 0.01
      %v1248 = vmul.f32 %v1125, 0.01
      %v1249 = vmul.f32 %v1128, 0.01
      %v1250 = vmul.f32 %v1131, 0.01
      %v1251 = vmul.f32 %v1134, 0.01
      %v1252 = vmul.f32 %v1137, 0.01
      %v1253 = vmul.f32 %v1140, 0.01
      %v1254 = vmul.f32 %v1143, 0.01
      %v1255 = vmul.f32 %v1146, 0.01
      %v1256 = vmul.f32 %v1149, 0.01
      %v1257 = vmul.f32 %v1152, 0.01
      %v1258 = vmul.f32 %v1155, 0.01
      %v1259 = vmul.f32 %v1158, 0.01
      %v1260 = vmul.f32 %v1161, 0.01
      %v1261 = vmul.f32 %v1164, 0.01
      %v1262 = vmul.f32 %v1167, 0.01
      %v1263 = vmul.f32 %v1170, 0.01
      %v1264 = vmul.f32 %v1173, 0.01
      %v1265 = vmul.f32 %v1176, 0.01
      %v1266 = vmul.f32 %v1179, 0.01
      %v1267 = vmul.f32 %v1182, 0.01
      %v1268 = vmul.f32 %v1185, 0.01
      %v1269 = vmul.f32 %v1188, 0.01
      %v1270 = vmul.f32 %v1191, 0.01
      %v1271 = vmul.f32 %v1194, 0.01
      %v1272 = vmul.f32 %v1197, 0.01
      %v1273 = vmul.f32 %v1200, 0.01
      %v1274 = vmul.f32 %v1203, 0.01
      %v1275 = vmul.f32 %v1206, 0.01
      %v1276 = vmul.f32 %v1209, 0.01
      %v1277 = vmul.f32 %v1212, 0.01
      %v1278 = vsel %vm1214, %v1119, %v1246
      %v1279 = vsel %vm1215, %v1122, %v1247
      %v1280 = vsel %vm1216, %v1125, %v1248
      %v1281 = vsel %vm1217, %v1128, %v1249
      %v1282 = vsel %vm1218, %v1131, %v1250
      %v1283 = vsel %vm1219, %v1134, %v1251
      %v1284 = vsel %vm1220, %v1137, %v1252
      %v1285 = vsel %vm1221, %v1140, %v1253
      %v1286 = vsel %vm1222, %v1143, %v1254
      %v1287 = vsel %vm1223, %v1146, %v1255
      %v1288 = vsel %vm1224, %v1149, %v1256
      %v1289 = vsel %vm1225, %v1152, %v1257
      %v1290 = vsel %vm1226, %v1155, %v1258
      %v1291 = vsel %vm1227, %v1158, %v1259
      %v1292 = vsel %vm1228, %v1161, %v1260
      %v1293 = vsel %vm1229, %v1164, %v1261
      %v1294 = vsel %vm1230, %v1167, %v1262
      %v1295 = vsel %vm1231, %v1170, %v1263
      %v1296 = vsel %vm1232, %v1173, %v1264
      %v1297 = vsel %vm1233, %v1176, %v1265
      %v1298 = vsel %vm1234, %v1179, %v1266
      %v1299 = vsel %vm1235, %v1182, %v1267
      %v1300 = vsel %vm1236, %v1185, %v1268
      %v1301 = vsel %vm1237, %v1188, %v1269
      %v1302 = vsel %vm1238, %v1191, %v1270
      %v1303 = vsel %vm1239, %v1194, %v1271
      %v1304 = vsel %vm1240, %v1197, %v1272
      %v1305 = vsel %vm1241, %v1200, %v1273
      %v1306 = vsel %vm1242, %v1203, %v1274
      %v1307 = vsel %vm1243, %v1206, %v1275
      %v1308 = vsel %vm1244, %v1209, %v1276
      %v1309 = vsel %vm1245, %v1212, %v1277
      %v1311 = vsel %vm691, %v1278, 0
      %v1314 = vsel %vm691, %v1279, 0
      %v1317 = vsel %vm691, %v1280, 0
      %v1320 = vsel %vm691, %v1281, 0
      %v1323 = vsel %vm691, %v1282, 0
      %v1326 = vsel %vm691, %v1283, 0
      %v1329 = vsel %vm691, %v1284, 0
      %v1332 = vsel %vm691, %v1285, 0
      %v1335 = vsel %vm691, %v1286, 0
      %v1338 = vsel %vm691, %v1287, 0
      %v1341 = vsel %vm691, %v1288, 0
      %v1344 = vsel %vm691, %v1289, 0
      %v1347 = vsel %vm691, %v1290, 0
      %v1350 = vsel %vm691, %v1291, 0
      %v1353 = vsel %vm691, %v1292, 0
      %v1356 = vsel %vm691, %v1293, 0
      %v1359 = vsel %vm691, %v1294, 0
      %v1362 = vsel %vm691, %v1295, 0
      %v1365 = vsel %vm691, %v1296, 0
      %v1368 = vsel %vm691, %v1297, 0
      %v1371 = vsel %vm691, %v1298, 0
      %v1374 = vsel %vm691, %v1299, 0
      %v1377 = vsel %vm691, %v1300, 0
      %v1380 = vsel %vm691, %v1301, 0
      %v1383 = vsel %vm691, %v1302, 0
      %v1386 = vsel %vm691, %v1303, 0
      %v1389 = vsel %vm691, %v1304, 0
      %v1392 = vsel %vm691, %v1305, 0
      %v1395 = vsel %vm691, %v1306, 0
      %v1398 = vsel %vm691, %v1307, 0
      %v1401 = vsel %vm691, %v1308, 0
      %v1404 = vsel %vm691, %v1309, 0
      %1406 = vmatpush.msra.mxu0 0.0
      %1407 = vmatpush.msra.mxu0 0.0
      %1408 = vmatpush.msra.mxu0 0.0
      %1409 = vmatpush.msra.mxu0 0.0
      %1410 = vmatpush.msra.mxu0 0.0
      %1411 = vmatpush.msra.mxu0 0.0
      %1412 = vmatpush.msra.mxu0 0.0
      %1413 = vmatpush.msra.mxu0 0.0
      %1414 = vmatpush.msra.mxu0 0.0
      %1415 = vmatpush.msra.mxu0 0.0
      %1416 = vmatpush.msra.mxu0 0.0
      %1417 = vmatpush.msra.mxu0 0.0
      %1418 = vmatpush.msra.mxu0 %v1000
      %1419 = vmatpush.msra.mxu0 %v999
      %1420 = vmatpush.msra.mxu0 %v998
      %1421 = vmatpush.msra.mxu0 %v997
      %1422 = vmatmul.f32.gmra.mxu0 %v1311
      %v1423 = vpop.f32.mrf.mxu0
      %v1424 = vadd.f32 %v1003, %v1423
      %1425 = vmatmul.f32.gmra.mxu0 %v1314
      %v1426 = vpop.f32.mrf.mxu0
      %v1427 = vadd.f32 %v1003, %v1426
      %1428 = vmatmul.f32.gmra.mxu0 %v1317
      %v1429 = vpop.f32.mrf.mxu0
      %v1430 = vadd.f32 %v1003, %v1429
      %1431 = vmatmul.f32.gmra.mxu0 %v1320
      %v1432 = vpop.f32.mrf.mxu0
      %v1433 = vadd.f32 %v1003, %v1432
      %1434 = vmatmul.f32.gmra.mxu0 %v1323
      %v1435 = vpop.f32.mrf.mxu0
      %v1436 = vadd.f32 %v1003, %v1435
      %1437 = vmatmul.f32.gmra.mxu0 %v1326
      %v1438 = vpop.f32.mrf.mxu0
      %v1439 = vadd.f32 %v1003, %v1438
      %1440 = vmatmul.f32.gmra.mxu0 %v1329
      %v1441 = vpop.f32.mrf.mxu0
      %v1442 = vadd.f32 %v1003, %v1441
      %1443 = vmatmul.f32.gmra.mxu0 %v1332
      %v1444 = vpop.f32.mrf.mxu0
      %v1445 = vadd.f32 %v1003, %v1444
      %1446 = vmatmul.f32.gmra.mxu0 %v1335
      %v1447 = vpop.f32.mrf.mxu0
      %v1448 = vadd.f32 %v1003, %v1447
      %1449 = vmatmul.f32.gmra.mxu0 %v1338
      %v1450 = vpop.f32.mrf.mxu0
      %v1451 = vadd.f32 %v1003, %v1450
      %1452 = vmatmul.f32.gmra.mxu0 %v1341
      %v1453 = vpop.f32.mrf.mxu0
      %v1454 = vadd.f32 %v1003, %v1453
      %1455 = vmatmul.f32.gmra.mxu0 %v1344
      %v1456 = vpop.f32.mrf.mxu0
      %v1457 = vadd.f32 %v1003, %v1456
      %1458 = vmatmul.f32.gmra.mxu0 %v1347
      %v1459 = vpop.f32.mrf.mxu0
      %v1460 = vadd.f32 %v1003, %v1459
      %1461 = vmatmul.f32.gmra.mxu0 %v1350
      %v1462 = vpop.f32.mrf.mxu0
      %v1463 = vadd.f32 %v1003, %v1462
      %1464 = vmatmul.f32.gmra.mxu0 %v1353
      %v1465 = vpop.f32.mrf.mxu0
      %v1466 = vadd.f32 %v1003, %v1465
      %1467 = vmatmul.f32.gmra.mxu0 %v1356
      %v1468 = vpop.f32.mrf.mxu0
      %v1469 = vadd.f32 %v1003, %v1468
      %1470 = vmatmul.f32.gmra.mxu0 %v1359
      %v1471 = vpop.f32.mrf.mxu0
      %v1472 = vadd.f32 %v1003, %v1471
      %1473 = vmatmul.f32.gmra.mxu0 %v1362
      %v1474 = vpop.f32.mrf.mxu0
      %v1475 = vadd.f32 %v1003, %v1474
      %1476 = vmatmul.f32.gmra.mxu0 %v1365
      %v1477 = vpop.f32.mrf.mxu0
      %v1478 = vadd.f32 %v1003, %v1477
      %1479 = vmatmul.f32.gmra.mxu0 %v1368
      %v1480 = vpop.f32.mrf.mxu0
      %v1481 = vadd.f32 %v1003, %v1480
      %1482 = vmatmul.f32.gmra.mxu0 %v1371
      %v1483 = vpop.f32.mrf.mxu0
      %v1484 = vadd.f32 %v1003, %v1483
      %1485 = vmatmul.f32.gmra.mxu0 %v1374
      %v1486 = vpop.f32.mrf.mxu0
      %v1487 = vadd.f32 %v1003, %v1486
      %1488 = vmatmul.f32.gmra.mxu0 %v1377
      %v1489 = vpop.f32.mrf.mxu0
      %v1490 = vadd.f32 %v1003, %v1489
      %1491 = vmatmul.f32.gmra.mxu0 %v1380
      %v1492 = vpop.f32.mrf.mxu0
      %v1493 = vadd.f32 %v1003, %v1492
      %1494 = vmatmul.f32.gmra.mxu0 %v1383
      %v1495 = vpop.f32.mrf.mxu0
      %v1496 = vadd.f32 %v1003, %v1495
      %1497 = vmatmul.f32.gmra.mxu0 %v1386
      %v1498 = vpop.f32.mrf.mxu0
      %v1499 = vadd.f32 %v1003, %v1498
      %1500 = vmatmul.f32.gmra.mxu0 %v1389
      %v1501 = vpop.f32.mrf.mxu0
      %v1502 = vadd.f32 %v1003, %v1501
      %1503 = vmatmul.f32.gmra.mxu0 %v1392
      %v1504 = vpop.f32.mrf.mxu0
      %v1505 = vadd.f32 %v1003, %v1504
      %1506 = vmatmul.f32.gmra.mxu0 %v1395
      %v1507 = vpop.f32.mrf.mxu0
      %v1508 = vadd.f32 %v1003, %v1507
      %1509 = vmatmul.f32.gmra.mxu0 %v1398
      %v1510 = vpop.f32.mrf.mxu0
      %v1511 = vadd.f32 %v1003, %v1510
      %1512 = vmatmul.f32.gmra.mxu0 %v1401
      %v1513 = vpop.f32.mrf.mxu0
      %v1514 = vadd.f32 %v1003, %v1513
      %1515 = vmatmul.f32.gmra.mxu0 %v1404
      %v1516 = vpop.f32.mrf.mxu0
      %v1517 = vadd.f32 %v1003, %v1516
      %1518 = vdwg.mxu0
      %v1519 = vtanh.pop %v1424
      %v1520 = vtanh.pop %v1427
      %v1521 = vtanh.pop %v1430
      %v1522 = vtanh.pop %v1433
      %v1523 = vtanh.pop %v1436
      %v1524 = vtanh.pop %v1439
      %v1525 = vtanh.pop %v1442
      %v1526 = vtanh.pop %v1445
      %v1527 = vtanh.pop %v1448
      %v1528 = vtanh.pop %v1451
      %v1529 = vtanh.pop %v1454
      %v1530 = vtanh.pop %v1457
      %v1531 = vtanh.pop %v1460
      %v1532 = vtanh.pop %v1463
      %v1533 = vtanh.pop %v1466
      %v1534 = vtanh.pop %v1469
      %v1535 = vtanh.pop %v1472
      %v1536 = vtanh.pop %v1475
      %v1537 = vtanh.pop %v1478
      %v1538 = vtanh.pop %v1481
      %v1539 = vtanh.pop %v1484
      %v1540 = vtanh.pop %v1487
      %v1541 = vtanh.pop %v1490
      %v1542 = vtanh.pop %v1493
      %v1543 = vtanh.pop %v1496
      %v1544 = vtanh.pop %v1499
      %v1545 = vtanh.pop %v1502
      %v1546 = vtanh.pop %v1505
      %v1547 = vtanh.pop %v1508
      %v1548 = vtanh.pop %v1511
      %v1549 = vtanh.pop %v1514
      %v1550 = vtanh.pop %v1517
      %v1551 = vld [vmem:[%s4] sm:$0xff]
      %v1552 = vld [vmem:[%s4 + $0x8] sm:$0xff]
      %v1553 = vld [vmem:[%s4 + $0x10] sm:$0xff]
      %v1554 = vld [vmem:[%s4 + $0x18] sm:$0xff]
      %v1555 = vld [vmem:[%s8] sm:$0x1]
      %v1557 = vperm.slane %v1555, 0
      %v1560 = vsel %vm691, %v1519, 0
      %v1563 = vsel %vm691, %v1520, 0
      %v1566 = vsel %vm691, %v1521, 0
      %v1569 = vsel %vm691, %v1522, 0
      %v1572 = vsel %vm691, %v1523, 0
      %v1575 = vsel %vm691, %v1524, 0
      %v1578 = vsel %vm691, %v1525, 0
      %v1581 = vsel %vm691, %v1526, 0
      %v1584 = vsel %vm691, %v1527, 0
      %v1587 = vsel %vm691, %v1528, 0
      %v1590 = vsel %vm691, %v1529, 0
      %v1593 = vsel %vm691, %v1530, 0
      %v1596 = vsel %vm691, %v1531, 0
      %v1599 = vsel %vm691, %v1532, 0
      %v1602 = vsel %vm691, %v1533, 0
      %v1605 = vsel %vm691, %v1534, 0
      %v1608 = vsel %vm691, %v1535, 0
      %v1611 = vsel %vm691, %v1536, 0
      %v1614 = vsel %vm691, %v1537, 0
      %v1617 = vsel %vm691, %v1538, 0
      %v1620 = vsel %vm691, %v1539, 0
      %v1623 = vsel %vm691, %v1540, 0
      %v1626 = vsel %vm691, %v1541, 0
      %v1629 = vsel %vm691, %v1542, 0
      %v1632 = vsel %vm691, %v1543, 0
      %v1635 = vsel %vm691, %v1544, 0
      %v1638 = vsel %vm691, %v1545, 0
      %v1641 = vsel %vm691, %v1546, 0
      %v1644 = vsel %vm691, %v1547, 0
      %v1647 = vsel %vm691, %v1548, 0
      %v1650 = vsel %vm691, %v1549, 0
      %v1653 = vsel %vm691, %v1550, 0
      %1655 = vmatpush.msra.mxu0 0.0
      %1656 = vmatpush.msra.mxu0 0.0
      %1657 = vmatpush.msra.mxu0 0.0
      %1658 = vmatpush.msra.mxu0 0.0
      %1659 = vmatpush.msra.mxu0 0.0
      %1660 = vmatpush.msra.mxu0 0.0
      %1661 = vmatpush.msra.mxu0 0.0
      %1662 = vmatpush.msra.mxu0 0.0
      %1663 = vmatpush.msra.mxu0 0.0
      %1664 = vmatpush.msra.mxu0 0.0
      %1665 = vmatpush.msra.mxu0 0.0
      %1666 = vmatpush.msra.mxu0 0.0
      %1667 = vmatpush.msra.mxu0 %v1554
      %1668 = vmatpush.msra.mxu0 %v1553
      %1669 = vmatpush.msra.mxu0 %v1552
      %1670 = vmatpush.msra.mxu0 %v1551
      %1671 = vmatmul.f32.gmra.mxu0 %v1560
      %v1672 = vpop.f32.mrf.mxu0
      %v1673 = vadd.f32 %v1557, %v1672
      %1674 = vmatmul.f32.gmra.mxu0 %v1563
      %v1675 = vpop.f32.mrf.mxu0
      %v1676 = vadd.f32 %v1557, %v1675
      %1677 = vmatmul.f32.gmra.mxu0 %v1566
      %v1678 = vpop.f32.mrf.mxu0
      %v1679 = vadd.f32 %v1557, %v1678
      %1680 = vmatmul.f32.gmra.mxu0 %v1569
      %v1681 = vpop.f32.mrf.mxu0
      %v1682 = vadd.f32 %v1557, %v1681
      %1683 = vmatmul.f32.gmra.mxu0 %v1572
      %v1684 = vpop.f32.mrf.mxu0
      %v1685 = vadd.f32 %v1557, %v1684
      %1686 = vmatmul.f32.gmra.mxu0 %v1575
      %v1687 = vpop.f32.mrf.mxu0
      %v1688 = vadd.f32 %v1557, %v1687
      %1689 = vmatmul.f32.gmra.mxu0 %v1578
      %v1690 = vpop.f32.mrf.mxu0
      %v1691 = vadd.f32 %v1557, %v1690
      %1692 = vmatmul.f32.gmra.mxu0 %v1581
      %v1693 = vpop.f32.mrf.mxu0
      %v1694 = vadd.f32 %v1557, %v1693
      %1695 = vmatmul.f32.gmra.mxu0 %v1584
      %v1696 = vpop.f32.mrf.mxu0
      %v1697 = vadd.f32 %v1557, %v1696
      %1698 = vmatmul.f32.gmra.mxu0 %v1587
      %v1699 = vpop.f32.mrf.mxu0
      %v1700 = vadd.f32 %v1557, %v1699
      %1701 = vmatmul.f32.gmra.mxu0 %v1590
      %v1702 = vpop.f32.mrf.mxu0
      %v1703 = vadd.f32 %v1557, %v1702
      %1704 = vmatmul.f32.gmra.mxu0 %v1593
      %v1705 = vpop.f32.mrf.mxu0
      %v1706 = vadd.f32 %v1557, %v1705
      %1707 = vmatmul.f32.gmra.mxu0 %v1596
      %v1708 = vpop.f32.mrf.mxu0
      %v1709 = vadd.f32 %v1557, %v1708
      %1710 = vmatmul.f32.gmra.mxu0 %v1599
      %v1711 = vpop.f32.mrf.mxu0
      %v1712 = vadd.f32 %v1557, %v1711
      %1713 = vmatmul.f32.gmra.mxu0 %v1602
      %v1714 = vpop.f32.mrf.mxu0
      %v1715 = vadd.f32 %v1557, %v1714
      %1716 = vmatmul.f32.gmra.mxu0 %v1605
      %v1717 = vpop.f32.mrf.mxu0
      %v1718 = vadd.f32 %v1557, %v1717
      %1719 = vmatmul.f32.gmra.mxu0 %v1608
      %v1720 = vpop.f32.mrf.mxu0
      %v1721 = vadd.f32 %v1557, %v1720
      %1722 = vmatmul.f32.gmra.mxu0 %v1611
      %v1723 = vpop.f32.mrf.mxu0
      %v1724 = vadd.f32 %v1557, %v1723
      %1725 = vmatmul.f32.gmra.mxu0 %v1614
      %v1726 = vpop.f32.mrf.mxu0
      %v1727 = vadd.f32 %v1557, %v1726
      %1728 = vmatmul.f32.gmra.mxu0 %v1617
      %v1729 = vpop.f32.mrf.mxu0
      %v1730 = vadd.f32 %v1557, %v1729
      %1731 = vmatmul.f32.gmra.mxu0 %v1620
      %v1732 = vpop.f32.mrf.mxu0
      %v1733 = vadd.f32 %v1557, %v1732
      %1734 = vmatmul.f32.gmra.mxu0 %v1623
      %v1735 = vpop.f32.mrf.mxu0
      %v1736 = vadd.f32 %v1557, %v1735
      %1737 = vmatmul.f32.gmra.mxu0 %v1626
      %v1738 = vpop.f32.mrf.mxu0
      %v1739 = vadd.f32 %v1557, %v1738
      %1740 = vmatmul.f32.gmra.mxu0 %v1629
      %v1741 = vpop.f32.mrf.mxu0
      %v1742 = vadd.f32 %v1557, %v1741
      %1743 = vmatmul.f32.gmra.mxu0 %v1632
      %v1744 = vpop.f32.mrf.mxu0
      %v1745 = vadd.f32 %v1557, %v1744
      %1746 = vmatmul.f32.gmra.mxu0 %v1635
      %v1747 = vpop.f32.mrf.mxu0
      %v1748 = vadd.f32 %v1557, %v1747
      %1749 = vmatmul.f32.gmra.mxu0 %v1638
      %v1750 = vpop.f32.mrf.mxu0
      %v1751 = vadd.f32 %v1557, %v1750
      %1752 = vmatmul.f32.gmra.mxu0 %v1641
      %v1753 = vpop.f32.mrf.mxu0
      %v1754 = vadd.f32 %v1557, %v1753
      %1755 = vmatmul.f32.gmra.mxu0 %v1644
      %v1756 = vpop.f32.mrf.mxu0
      %v1757 = vadd.f32 %v1557, %v1756
      %1758 = vmatmul.f32.gmra.mxu0 %v1647
      %v1759 = vpop.f32.mrf.mxu0
      %v1760 = vadd.f32 %v1557, %v1759
      %1761 = vmatmul.f32.gmra.mxu0 %v1650
      %v1762 = vpop.f32.mrf.mxu0
      %v1763 = vadd.f32 %v1557, %v1762
      %1764 = vmatmul.f32.gmra.mxu0 %v1653
      %v1765 = vpop.f32.mrf.mxu0
      %v1766 = vadd.f32 %v1557, %v1765
      %1767 = vdwg.mxu0
      %1768 = vst.msk [vmem:[%s334] sm:$0xff] %vm373, %v1673
      %1769 = vst.msk [vmem:[%s334 + $0x8] sm:$0xff] %vm373, %v1676
      %1770 = vst.msk [vmem:[%s334 + $0x10] sm:$0xff] %vm373, %v1679
      %1771 = vst.msk [vmem:[%s334 + $0x18] sm:$0xff] %vm373, %v1682
      %1772 = vst.msk [vmem:[%s334 + $0x20] sm:$0xff] %vm373, %v1685
      %1773 = vst.msk [vmem:[%s334 + $0x28] sm:$0xff] %vm373, %v1688
      %1774 = vst.msk [vmem:[%s334 + $0x30] sm:$0xff] %vm373, %v1691
      %1775 = vst.msk [vmem:[%s334 + $0x38] sm:$0xff] %vm373, %v1694
      %1776 = vst.msk [vmem:[%s334 + $0x40] sm:$0xff] %vm373, %v1697
      %1777 = vst.msk [vmem:[%s334 + $0x48] sm:$0xff] %vm373, %v1700
      %1778 = vst.msk [vmem:[%s334 + $0x50] sm:$0xff] %vm373, %v1703
      %1779 = vst.msk [vmem:[%s334 + $0x58] sm:$0xff] %vm373, %v1706
      %1780 = vst.msk [vmem:[%s334 + $0x60] sm:$0xff] %vm373, %v1709
      %1781 = vst.msk [vmem:[%s334 + $0x68] sm:$0xff] %vm373, %v1712
      %1782 = vst.msk [vmem:[%s334 + $0x70] sm:$0xff] %vm373, %v1715
      %1783 = vst.msk [vmem:[%s334 + $0x78] sm:$0xff] %vm373, %v1718
      %1784 = vst.msk [vmem:[%s334 + $0x80] sm:$0xff] %vm373, %v1721
      %1785 = vst.msk [vmem:[%s334 + $0x88] sm:$0xff] %vm373, %v1724
      %1786 = vst.msk [vmem:[%s334 + $0x90] sm:$0xff] %vm373, %v1727
      %1787 = vst.msk [vmem:[%s334 + $0x98] sm:$0xff] %vm373, %v1730
      %1788 = vst.msk [vmem:[%s334 + $0xa0] sm:$0xff] %vm373, %v1733
      %1789 = vst.msk [vmem:[%s334 + $0xa8] sm:$0xff] %vm373, %v1736
      %1790 = vst.msk [vmem:[%s334 + $0xb0] sm:$0xff] %vm373, %v1739
      %1791 = vst.msk [vmem:[%s334 + $0xb8] sm:$0xff] %vm373, %v1742
      %1792 = vst.msk [vmem:[%s334 + $0xc0] sm:$0xff] %vm373, %v1745
      %1793 = vst.msk [vmem:[%s334 + $0xc8] sm:$0xff] %vm373, %v1748
      %1794 = vst.msk [vmem:[%s334 + $0xd0] sm:$0xff] %vm373, %v1751
      %1795 = vst.msk [vmem:[%s334 + $0xd8] sm:$0xff] %vm373, %v1754
      %1796 = vst.msk [vmem:[%s334 + $0xe0] sm:$0xff] %vm373, %v1757
      %1797 = vst.msk [vmem:[%s334 + $0xe8] sm:$0xff] %vm373, %v1760
      %1798 = vst.msk [vmem:[%s334 + $0xf0] sm:$0xff] %vm373, %v1763
      %1799 = vst.msk [vmem:[%s334 + $0xf8] sm:$0xff] %vm373, %v1766
      %s1800 = smul.u32 32, %s20
      %p1801 = scmp.lt.s32.totalorder %s1800, 127
      %s1802 = scalar_select %p1801, %s1800, 127
      %s1803 = smul.addr %s1802, 8
      %s1804 = scalar_lea.vmem %s9, %s1803
      // Predicated region
      $region57: #{tpu_custom_call.1} parent=55 // pred_check
        %p1805 = pneg %p232
      $region58: #{tpu_custom_call.1} parent=55 // pred_check_branch
        %1807 = sbr.rel (%p1805) target = $region60
      $region59: #{tpu_custom_call.1} parent=55 // pred_region
        %s1808 = smul.u32 32, %s20
      $region60: #{tpu_custom_call.1} parent=55 // pred_fallthru
        _
    $region56: #{tpu_custom_call.1} parent=5 // pred_fallthru
      _
    %p1809 = scmp.le.s32.totalorder 2, %s15
    // Predicated region
    $region61: #{tpu_custom_call.1} parent=5 // pred_check
      %p1810 = pneg %p1809
    $region62: #{tpu_custom_call.1} parent=5 // pred_check_branch
      %1812 = sbr.rel (%p1810) target = $region64
    $region63: #{tpu_custom_call.1} parent=5 // pred_region
      %s1813 = ssub.s32 %s15, 2
      // Predicated region
      $region65: #{tpu_custom_call.1} parent=63 // pred_check
        %p1814 = pneg %p238
      $region66: #{tpu_custom_call.1} parent=63 // pred_check_branch
        %1816 = sbr.rel (%p1814) target = $region68
      $region67: #{tpu_custom_call.1} parent=63 // pred_region
        %s1817 = smul.u32 32, %s21
        %p1818 = scmp.lt.s32.totalorder %s1817, 127
        %s1819 = scalar_select %p1818, %s1817, 127
        %s1820 = smul.addr %s1819, 8
        %s1821 = scalar_lea.vmem %s9, %s1820
      $region68: #{tpu_custom_call.1} parent=63 // pred_fallthru
        _
    $region64: #{tpu_custom_call.1} parent=5 // pred_fallthru
      _
  $region6: #{tpu_custom_call.1} parent=0 // loop_footer
    %s19 = sadd.s32 1, %s15
  $region7: #{tpu_custom_call.1} parent=0 // loop_footer_branch
    %14 = sbr.rel target = $region3
  $region8: #{tpu_custom_call.1} parent=0 // loop_exit
    _

</llo_original>
